<compile_context>
chip_gen: v5e
topology: v5e:2x2
jax: 0.10.0
libtpu: 0.0.40
codegen_flags: <defaults>
</compile_context>

<pallas_src>
import jax
import jax.numpy as jnp
from jax import lax
from jax.experimental import pallas as pl
from jax.experimental.pallas import tpu as pltpu

MM_DTYPE = jnp.bfloat16      # matmul-operand dtype; accumulation is f32 via preferred_element_type
LN_EPS = 1e-12               # BertConfig.layer_norm_eps default
MASK_NEG = -10000.0          # HF additive attention-mask bias


def _dot(a, b):
    return jnp.dot(a.astype(MM_DTYPE), b.astype(MM_DTYPE),
                   preferred_element_type=jnp.float32)


def _bmm_nt(a, b):
    # batched a @ b.T :  (B,Q,D) x (B,K,D) -> (B,Q,K), MXU-native NT matmul, f32 accumulate.
    return jnp.einsum('bqd,bkd->bqk', a.astype(MM_DTYPE), b.astype(MM_DTYPE),
                      preferred_element_type=jnp.float32)


def _bmm_nn(a, b):
    # batched a @ b :  (B,Q,K) x (B,K,D) -> (B,Q,D), f32 accumulate.
    return jnp.einsum('bqk,bkd->bqd', a.astype(MM_DTYPE), b.astype(MM_DTYPE),
                      preferred_element_type=jnp.float32)


def _layer_norm(x, gamma, beta):
    mu = jnp.mean(x, axis=-1, keepdims=True)
    xc = x - mu
    var = jnp.mean(xc * xc, axis=-1, keepdims=True)
    return xc * lax.rsqrt(var + LN_EPS) * gamma + beta


def _make_kernel(B_TILE, S, E, NH, I):
    Dh = E // NH
    scale = 1.0 / float(Dh) ** 0.5

    def kernel(emb_ref, mask_ref,
               wqkv_ref, bqkv_ref, wo_ref, bo_ref, ln1g_ref, ln1b_ref,
               w1_ref, b1_ref, w2_ref, b2_ref, ln2g_ref, ln2b_ref,
               out_ref):
        # ---- fused QKV projection over the whole (B_TILE*S, E) slab (one big MXU matmul) ----
        x = emb_ref[...].astype(jnp.float32)              # (Bt, S, E)
        x2 = x.reshape(B_TILE * S, E)                     # (Bt*S, E)
        qkv = _dot(x2, wqkv_ref[...]) + bqkv_ref[...]     # (Bt*S, 3E) f32

        mask = mask_ref[...]                              # (Bt, 1, S) additive bias, bcast over queries

        # ---- multi-head scaled-dot-product attention, batched over the batch tile ----
        head_ctx = []
        for h in range(NH):                               # static, small head loop
            c0 = h * Dh
            qh = qkv[:, c0:c0 + Dh].reshape(B_TILE, S, Dh)
            kh = qkv[:, E + c0:E + c0 + Dh].reshape(B_TILE, S, Dh)
            vh = qkv[:, 2 * E + c0:2 * E + c0 + Dh].reshape(B_TILE, S, Dh)
            s = _bmm_nt(qh, kh) * scale + mask            # (Bt, S, S)
            s = s - jnp.max(s, axis=-1, keepdims=True)
            p = jnp.exp(s)
            p = p * pl.reciprocal(jnp.sum(p, axis=-1, keepdims=True), approx=False)
            head_ctx.append(_bmm_nn(p, vh))               # (Bt, S, Dh) f32
        ctx = jnp.concatenate(head_ctx, axis=-1)          # (Bt, S, E)
        ctx2 = ctx.reshape(B_TILE * S, E)                 # (Bt*S, E)

        # ---- BertSelfOutput: dense + residual + LayerNorm ----
        attn = _dot(ctx2, wo_ref[...]) + bo_ref[...]
        h1 = _layer_norm(attn + x2, ln1g_ref[...], ln1b_ref[...])

        # ---- BertIntermediate + BertOutput: GELU FFN + residual + LayerNorm ----
        ffn = jax.nn.gelu(_dot(h1, w1_ref[...]) + b1_ref[...], approximate=True)
        ffn = _dot(ffn, w2_ref[...]) + b2_ref[...]
        h2 = _layer_norm(ffn + h1, ln2g_ref[...], ln2b_ref[...])

        # ---- sentence vector: max over the sequence dim, one lane-dense (Bt, 1, E) store ----
        out_ref[...] = jnp.max(h2.reshape(B_TILE, S, E), axis=1, keepdims=True)

    return kernel


def w2v_transformer_forward(ipt_ids, attn_masks, params, *, num_heads, b_tile=1):
    B, S = ipt_ids.shape
    E = params["word_emb"].shape[1]
    I = params["w_1"].shape[1]
    assert B % b_tile == 0 and E % num_heads == 0

    # Glue (plain JAX / XLA): embedding gather and the additive extended attention mask.
    emb = jnp.take(params["word_emb"], ipt_ids, axis=0).astype(jnp.float32)      # (B, S, E)
    ext_mask = ((1.0 - attn_masks.astype(jnp.float32)) * MASK_NEG)[:, None, :]   # (B, 1, S)

    mm = lambda a: a.astype(MM_DTYPE)                      # weight matrices -> bf16 operands
    row = lambda a: a.reshape(1, -1).astype(jnp.float32)   # bias / LN vectors -> (1, N) f32 rows

    kernel = _make_kernel(b_tile, S, E, num_heads, I)

    def full(shape):
        nd = len(shape)
        return pl.BlockSpec(shape, lambda b, _nd=nd: (0,) * _nd)   # weights: resident, same block each step

    out = pl.pallas_call(
        kernel,
        out_shape=jax.ShapeDtypeStruct((B, 1, E), jnp.float32),
        grid=(B // b_tile,),
        in_specs=[
            pl.BlockSpec((b_tile, S, E), lambda b: (b, 0, 0)),     # embeddings, tiled over batch
            pl.BlockSpec((b_tile, 1, S), lambda b: (b, 0, 0)),     # additive mask, tiled over batch
            full((E, 3 * E)), full((1, 3 * E)),                    # fused QKV
            full((E, E)), full((1, E)), full((1, E)), full((1, E)),  # attn out proj + LN1
            full((E, I)), full((1, I)),                            # FFN in
            full((I, E)), full((1, E)), full((1, E)), full((1, E)),  # FFN out + LN2
        ],
        out_specs=pl.BlockSpec((b_tile, 1, E), lambda b: (b, 0, 0)),
        compiler_params=pltpu.CompilerParams(dimension_semantics=("parallel",)),
    )(emb, ext_mask,
      mm(params["w_qkv"]), row(params["b_qkv"]),
      mm(params["w_o"]), row(params["b_o"]), row(params["ln1_g"]), row(params["ln1_b"]),
      mm(params["w_1"]), row(params["b_1"]),
      mm(params["w_2"]), row(params["b_2"]), row(params["ln2_g"]), row(params["ln2_b"]))
    return out[:, 0, :]                                            # (B, E) sentence vectors


def init_params(key, vocab, E, I):
    ks = jax.random.split(key, 10)
    n = lambda k, s, scale=0.05: scale * jax.random.normal(k, s, jnp.float32)
    return {
        "word_emb": n(ks[0], (vocab, E), 0.1),
        # PyTorch nn.Linear stores (out, in); kept transposed here for x @ W.
        # Q/K/V fused along the output dim: w_qkv = concat([Wq.T, Wk.T, Wv.T], axis=1).
        "w_qkv": n(ks[1], (E, 3 * E)),
        "b_qkv": n(ks[2], (3 * E,)),
        "w_o": n(ks[3], (E, E)),
        "b_o": n(ks[4], (E,)),
        "ln1_g": jnp.ones((E,), jnp.float32),
        "ln1_b": jnp.zeros((E,), jnp.float32),
        "w_1": n(ks[5], (E, I)),
        "b_1": n(ks[6], (I,)),
        "w_2": n(ks[7], (I, E)),
        "b_2": n(ks[8], (E,)),
        "ln2_g": jnp.ones((E,), jnp.float32),
        "ln2_b": jnp.zeros((E,), jnp.float32),
    }


if __name__ == "__main__":
    # Small shapes consistent with the module (real model uses embedding_size=300):
    # batch=2, seq=8, hidden=32, 4 heads (head_dim=8), FFN intermediate=64.
    B, S, E, NH, I = 2, 8, 32, 4, 64
    vocab = 128

    key = jax.random.PRNGKey(0)
    kp, ki = jax.random.split(key)
    params = init_params(kp, vocab, E, I)

    lengths = jnp.array([8, 5], dtype=jnp.int32)
    attn_masks = (jnp.arange(S)[None, :] < lengths[:, None]).astype(jnp.int32)
    ids = jax.random.randint(ki, (B, S), 0, vocab, dtype=jnp.int32)
    ids = jnp.where(attn_masks == 1, ids, 1)   # Pad_Sequence pads with id 1 (torch.ones)

    out = w2v_transformer_forward(ids, attn_masks, params, num_heads=NH, b_tile=1)
    out = jax.block_until_ready(out)
    assert out.shape == (B, E)
    assert bool(jnp.all(jnp.isfinite(out)))
    print("KERNEL_OK")
</pallas_src>

<mosaic_0001>
module attributes {stable_mosaic.version = 11 : i64} {
  func.func @kernel(%arg0: i32, %arg1: memref<1x8x32xf32, #tpu.memory_space<vmem>>, %arg2: memref<1x1x8xf32, #tpu.memory_space<vmem>>, %arg3: memref<32x96xbf16, #tpu.memory_space<vmem>>, %arg4: memref<1x96xf32, #tpu.memory_space<vmem>>, %arg5: memref<32x32xbf16, #tpu.memory_space<vmem>>, %arg6: memref<1x32xf32, #tpu.memory_space<vmem>>, %arg7: memref<1x32xf32, #tpu.memory_space<vmem>>, %arg8: memref<1x32xf32, #tpu.memory_space<vmem>>, %arg9: memref<32x64xbf16, #tpu.memory_space<vmem>>, %arg10: memref<1x64xf32, #tpu.memory_space<vmem>>, %arg11: memref<64x32xbf16, #tpu.memory_space<vmem>>, %arg12: memref<1x32xf32, #tpu.memory_space<vmem>>, %arg13: memref<1x32xf32, #tpu.memory_space<vmem>>, %arg14: memref<1x32xf32, #tpu.memory_space<vmem>>, %arg15: memref<1x1x32xf32, #tpu.memory_space<vmem>>) attributes {dimension_semantics = [#tpu.dimension_semantics<parallel>], iteration_bounds = array<i64: 2>, scalar_prefetch = 0 : i64, scratch_operands = 0 : i64, tpu.core_type = #tpu.core_type<tc>, window_params = [{transform_indices = @transform_0, window_bounds = array<i64: 1, 8, 32>}, {transform_indices = @transform_1, window_bounds = array<i64: 1, 1, 8>}, {pipeline_mode = #tpu.pipeline_mode<synchronous>, transform_indices = @transform_2, window_bounds = array<i64: 32, 96>}, {pipeline_mode = #tpu.pipeline_mode<synchronous>, transform_indices = @transform_3, window_bounds = array<i64: 1, 96>}, {pipeline_mode = #tpu.pipeline_mode<synchronous>, transform_indices = @transform_4, window_bounds = array<i64: 32, 32>}, {pipeline_mode = #tpu.pipeline_mode<synchronous>, transform_indices = @transform_5, window_bounds = array<i64: 1, 32>}, {pipeline_mode = #tpu.pipeline_mode<synchronous>, transform_indices = @transform_6, window_bounds = array<i64: 1, 32>}, {pipeline_mode = #tpu.pipeline_mode<synchronous>, transform_indices = @transform_7, window_bounds = array<i64: 1, 32>}, {pipeline_mode = #tpu.pipeline_mode<synchronous>, transform_indices = @transform_8, window_bounds = array<i64: 32, 64>}, {pipeline_mode = #tpu.pipeline_mode<synchronous>, transform_indices = @transform_9, window_bounds = array<i64: 1, 64>}, {pipeline_mode = #tpu.pipeline_mode<synchronous>, transform_indices = @transform_10, window_bounds = array<i64: 64, 32>}, {pipeline_mode = #tpu.pipeline_mode<synchronous>, transform_indices = @transform_11, window_bounds = array<i64: 1, 32>}, {pipeline_mode = #tpu.pipeline_mode<synchronous>, transform_indices = @transform_12, window_bounds = array<i64: 1, 32>}, {pipeline_mode = #tpu.pipeline_mode<synchronous>, transform_indices = @transform_13, window_bounds = array<i64: 1, 32>}, {transform_indices = @transform_14, window_bounds = array<i64: 1, 1, 32>}]} {
    %c0 = arith.constant 0 : index
    %c0_0 = arith.constant 0 : index
    %c0_1 = arith.constant 0 : index
    %0 = vector.load %arg1[%c0, %c0_0, %c0_1] : memref<1x8x32xf32, #tpu.memory_space<vmem>>, vector<1x8x32xf32>
    %1 = vector.shape_cast %0 : vector<1x8x32xf32> to vector<8x32xf32>
    %c0_2 = arith.constant 0 : index
    %c0_3 = arith.constant 0 : index
    %2 = vector.load %arg3[%c0_2, %c0_3] : memref<32x96xbf16, #tpu.memory_space<vmem>>, vector<32x96xbf16>
    %3 = arith.truncf %1 : vector<8x32xf32> to vector<8x32xbf16>
    %cst = arith.constant dense<0.000000e+00> : vector<8x96xf32>
    %4 = tpu.matmul %3, %2, %cst {dimension_numbers = #tpu.dot_dimension_numbers<[1], [0], [0], [1], [0, 0, 1, 1], [], []>} : vector<8x32xbf16>, vector<32x96xbf16>, vector<8x96xf32> -> vector<8x96xf32>
    %c0_4 = arith.constant 0 : index
    %c0_5 = arith.constant 0 : index
    %5 = vector.load %arg4[%c0_4, %c0_5] : memref<1x96xf32, #tpu.memory_space<vmem>>, vector<1x96xf32>
    %6 = vector.broadcast %5 : vector<1x96xf32> to vector<8x96xf32>
    %7 = arith.addf %4, %6 : vector<8x96xf32>
    %c0_6 = arith.constant 0 : index
    %c0_7 = arith.constant 0 : index
    %c0_8 = arith.constant 0 : index
    %8 = vector.load %arg2[%c0_6, %c0_7, %c0_8] : memref<1x1x8xf32, #tpu.memory_space<vmem>>, vector<1x1x8xf32>
    %9 = vector.extract_strided_slice %7 {offsets = [0, 0], sizes = [8, 8], strides = [1, 1]} : vector<8x96xf32> to vector<8x8xf32>
    %10 = vector.shape_cast %9 : vector<8x8xf32> to vector<1x8x8xf32>
    %11 = vector.extract_strided_slice %7 {offsets = [0, 32], sizes = [8, 8], strides = [1, 1]} : vector<8x96xf32> to vector<8x8xf32>
    %12 = vector.shape_cast %11 : vector<8x8xf32> to vector<1x8x8xf32>
    %13 = vector.extract_strided_slice %7 {offsets = [0, 64], sizes = [8, 8], strides = [1, 1]} : vector<8x96xf32> to vector<8x8xf32>
    %14 = vector.shape_cast %13 : vector<8x8xf32> to vector<1x8x8xf32>
    %15 = arith.truncf %10 : vector<1x8x8xf32> to vector<1x8x8xbf16>
    %16 = arith.truncf %12 : vector<1x8x8xf32> to vector<1x8x8xbf16>
    "tpu.trace_start"() <{level = 10 : i32, message = "bqd,bkd->bqk"}> : () -> ()
    %cst_9 = arith.constant dense<0.000000e+00> : vector<1x8x8xf32>
    %17 = tpu.matmul %15, %16, %cst_9 {dimension_numbers = #tpu.dot_dimension_numbers<[2], [2], [1], [1], [0, 0, 0, 1, 1, 1], [0], [0]>} : vector<1x8x8xbf16>, vector<1x8x8xbf16>, vector<1x8x8xf32> -> vector<1x8x8xf32>
    "tpu.trace_stop"() : () -> ()
    %cst_10 = arith.constant 0.353553385 : f32
    %18 = vector.broadcast %cst_10 : f32 to vector<1x8x8xf32>
    %19 = arith.mulf %17, %18 : vector<1x8x8xf32>
    %20 = vector.broadcast %8 : vector<1x1x8xf32> to vector<1x8x8xf32>
    %21 = arith.addf %19, %20 : vector<1x8x8xf32>
    %cst_11 = arith.constant dense<0xFF800000> : vector<1x8xf32>
    %22 = vector.multi_reduction <maximumf>, %21, %cst_11 [2] : vector<1x8x8xf32> to vector<1x8xf32>
    %23 = vector.shape_cast %22 : vector<1x8xf32> to vector<1x8x1xf32>
    %24 = vector.broadcast %23 : vector<1x8x1xf32> to vector<1x8x8xf32>
    %25 = arith.subf %21, %24 : vector<1x8x8xf32>
    %26 = math.exp %25 : vector<1x8x8xf32>
    %cst_12 = arith.constant dense<0.000000e+00> : vector<1x8xf32>
    %27 = vector.multi_reduction <add>, %26, %cst_12 [2] : vector<1x8x8xf32> to vector<1x8xf32>
    %28 = vector.shape_cast %27 : vector<1x8xf32> to vector<1x8x1xf32>
    %29 = tpu.reciprocal %28 : vector<1x8x1xf32> -> vector<1x8x1xf32>
    %30 = vector.broadcast %29 : vector<1x8x1xf32> to vector<1x8x8xf32>
    %31 = arith.mulf %26, %30 : vector<1x8x8xf32>
    %32 = arith.truncf %31 : vector<1x8x8xf32> to vector<1x8x8xbf16>
    %33 = arith.truncf %14 : vector<1x8x8xf32> to vector<1x8x8xbf16>
    "tpu.trace_start"() <{level = 10 : i32, message = "bqk,bkd->bqd"}> : () -> ()
    %cst_13 = arith.constant dense<0.000000e+00> : vector<1x8x8xf32>
    %34 = tpu.matmul %32, %33, %cst_13 {dimension_numbers = #tpu.dot_dimension_numbers<[2], [1], [1], [2], [0, 0, 0, 1, 1, 2], [0], [0]>} : vector<1x8x8xbf16>, vector<1x8x8xbf16>, vector<1x8x8xf32> -> vector<1x8x8xf32>
    "tpu.trace_stop"() : () -> ()
    %35 = vector.extract_strided_slice %7 {offsets = [0, 8], sizes = [8, 8], strides = [1, 1]} : vector<8x96xf32> to vector<8x8xf32>
    %36 = vector.shape_cast %35 : vector<8x8xf32> to vector<1x8x8xf32>
    %37 = vector.extract_strided_slice %7 {offsets = [0, 40], sizes = [8, 8], strides = [1, 1]} : vector<8x96xf32> to vector<8x8xf32>
    %38 = vector.shape_cast %37 : vector<8x8xf32> to vector<1x8x8xf32>
    %39 = vector.extract_strided_slice %7 {offsets = [0, 72], sizes = [8, 8], strides = [1, 1]} : vector<8x96xf32> to vector<8x8xf32>
    %40 = vector.shape_cast %39 : vector<8x8xf32> to vector<1x8x8xf32>
    %41 = arith.truncf %36 : vector<1x8x8xf32> to vector<1x8x8xbf16>
    %42 = arith.truncf %38 : vector<1x8x8xf32> to vector<1x8x8xbf16>
    "tpu.trace_start"() <{level = 10 : i32, message = "bqd,bkd->bqk"}> : () -> ()
    %cst_14 = arith.constant dense<0.000000e+00> : vector<1x8x8xf32>
    %43 = tpu.matmul %41, %42, %cst_14 {dimension_numbers = #tpu.dot_dimension_numbers<[2], [2], [1], [1], [0, 0, 0, 1, 1, 1], [0], [0]>} : vector<1x8x8xbf16>, vector<1x8x8xbf16>, vector<1x8x8xf32> -> vector<1x8x8xf32>
    "tpu.trace_stop"() : () -> ()
    %cst_15 = arith.constant 0.353553385 : f32
    %44 = vector.broadcast %cst_15 : f32 to vector<1x8x8xf32>
    %45 = arith.mulf %43, %44 : vector<1x8x8xf32>
    %46 = vector.broadcast %8 : vector<1x1x8xf32> to vector<1x8x8xf32>
    %47 = arith.addf %45, %46 : vector<1x8x8xf32>
    %cst_16 = arith.constant dense<0xFF800000> : vector<1x8xf32>
    %48 = vector.multi_reduction <maximumf>, %47, %cst_16 [2] : vector<1x8x8xf32> to vector<1x8xf32>
    %49 = vector.shape_cast %48 : vector<1x8xf32> to vector<1x8x1xf32>
    %50 = vector.broadcast %49 : vector<1x8x1xf32> to vector<1x8x8xf32>
    %51 = arith.subf %47, %50 : vector<1x8x8xf32>
    %52 = math.exp %51 : vector<1x8x8xf32>
    %cst_17 = arith.constant dense<0.000000e+00> : vector<1x8xf32>
    %53 = vector.multi_reduction <add>, %52, %cst_17 [2] : vector<1x8x8xf32> to vector<1x8xf32>
    %54 = vector.shape_cast %53 : vector<1x8xf32> to vector<1x8x1xf32>
    %55 = tpu.reciprocal %54 : vector<1x8x1xf32> -> vector<1x8x1xf32>
    %56 = vector.broadcast %55 : vector<1x8x1xf32> to vector<1x8x8xf32>
    %57 = arith.mulf %52, %56 : vector<1x8x8xf32>
    %58 = arith.truncf %57 : vector<1x8x8xf32> to vector<1x8x8xbf16>
    %59 = arith.truncf %40 : vector<1x8x8xf32> to vector<1x8x8xbf16>
    "tpu.trace_start"() <{level = 10 : i32, message = "bqk,bkd->bqd"}> : () -> ()
    %cst_18 = arith.constant dense<0.000000e+00> : vector<1x8x8xf32>
    %60 = tpu.matmul %58, %59, %cst_18 {dimension_numbers = #tpu.dot_dimension_numbers<[2], [1], [1], [2], [0, 0, 0, 1, 1, 2], [0], [0]>} : vector<1x8x8xbf16>, vector<1x8x8xbf16>, vector<1x8x8xf32> -> vector<1x8x8xf32>
    "tpu.trace_stop"() : () -> ()
    %61 = vector.extract_strided_slice %7 {offsets = [0, 16], sizes = [8, 8], strides = [1, 1]} : vector<8x96xf32> to vector<8x8xf32>
    %62 = vector.shape_cast %61 : vector<8x8xf32> to vector<1x8x8xf32>
    %63 = vector.extract_strided_slice %7 {offsets = [0, 48], sizes = [8, 8], strides = [1, 1]} : vector<8x96xf32> to vector<8x8xf32>
    %64 = vector.shape_cast %63 : vector<8x8xf32> to vector<1x8x8xf32>
    %65 = vector.extract_strided_slice %7 {offsets = [0, 80], sizes = [8, 8], strides = [1, 1]} : vector<8x96xf32> to vector<8x8xf32>
    %66 = vector.shape_cast %65 : vector<8x8xf32> to vector<1x8x8xf32>
    %67 = arith.truncf %62 : vector<1x8x8xf32> to vector<1x8x8xbf16>
    %68 = arith.truncf %64 : vector<1x8x8xf32> to vector<1x8x8xbf16>
    "tpu.trace_start"() <{level = 10 : i32, message = "bqd,bkd->bqk"}> : () -> ()
    %cst_19 = arith.constant dense<0.000000e+00> : vector<1x8x8xf32>
    %69 = tpu.matmul %67, %68, %cst_19 {dimension_numbers = #tpu.dot_dimension_numbers<[2], [2], [1], [1], [0, 0, 0, 1, 1, 1], [0], [0]>} : vector<1x8x8xbf16>, vector<1x8x8xbf16>, vector<1x8x8xf32> -> vector<1x8x8xf32>
    "tpu.trace_stop"() : () -> ()
    %cst_20 = arith.constant 0.353553385 : f32
    %70 = vector.broadcast %cst_20 : f32 to vector<1x8x8xf32>
    %71 = arith.mulf %69, %70 : vector<1x8x8xf32>
    %72 = vector.broadcast %8 : vector<1x1x8xf32> to vector<1x8x8xf32>
    %73 = arith.addf %71, %72 : vector<1x8x8xf32>
    %cst_21 = arith.constant dense<0xFF800000> : vector<1x8xf32>
    %74 = vector.multi_reduction <maximumf>, %73, %cst_21 [2] : vector<1x8x8xf32> to vector<1x8xf32>
    %75 = vector.shape_cast %74 : vector<1x8xf32> to vector<1x8x1xf32>
    %76 = vector.broadcast %75 : vector<1x8x1xf32> to vector<1x8x8xf32>
    %77 = arith.subf %73, %76 : vector<1x8x8xf32>
    %78 = math.exp %77 : vector<1x8x8xf32>
    %cst_22 = arith.constant dense<0.000000e+00> : vector<1x8xf32>
    %79 = vector.multi_reduction <add>, %78, %cst_22 [2] : vector<1x8x8xf32> to vector<1x8xf32>
    %80 = vector.shape_cast %79 : vector<1x8xf32> to vector<1x8x1xf32>
    %81 = tpu.reciprocal %80 : vector<1x8x1xf32> -> vector<1x8x1xf32>
    %82 = vector.broadcast %81 : vector<1x8x1xf32> to vector<1x8x8xf32>
    %83 = arith.mulf %78, %82 : vector<1x8x8xf32>
    %84 = arith.truncf %83 : vector<1x8x8xf32> to vector<1x8x8xbf16>
    %85 = arith.truncf %66 : vector<1x8x8xf32> to vector<1x8x8xbf16>
    "tpu.trace_start"() <{level = 10 : i32, message = "bqk,bkd->bqd"}> : () -> ()
    %cst_23 = arith.constant dense<0.000000e+00> : vector<1x8x8xf32>
    %86 = tpu.matmul %84, %85, %cst_23 {dimension_numbers = #tpu.dot_dimension_numbers<[2], [1], [1], [2], [0, 0, 0, 1, 1, 2], [0], [0]>} : vector<1x8x8xbf16>, vector<1x8x8xbf16>, vector<1x8x8xf32> -> vector<1x8x8xf32>
    "tpu.trace_stop"() : () -> ()
    %87 = vector.extract_strided_slice %7 {offsets = [0, 24], sizes = [8, 8], strides = [1, 1]} : vector<8x96xf32> to vector<8x8xf32>
    %88 = vector.shape_cast %87 : vector<8x8xf32> to vector<1x8x8xf32>
    %89 = vector.extract_strided_slice %7 {offsets = [0, 56], sizes = [8, 8], strides = [1, 1]} : vector<8x96xf32> to vector<8x8xf32>
    %90 = vector.shape_cast %89 : vector<8x8xf32> to vector<1x8x8xf32>
    %91 = vector.extract_strided_slice %7 {offsets = [0, 88], sizes = [8, 8], strides = [1, 1]} : vector<8x96xf32> to vector<8x8xf32>
    %92 = vector.shape_cast %91 : vector<8x8xf32> to vector<1x8x8xf32>
    %93 = arith.truncf %88 : vector<1x8x8xf32> to vector<1x8x8xbf16>
    %94 = arith.truncf %90 : vector<1x8x8xf32> to vector<1x8x8xbf16>
    "tpu.trace_start"() <{level = 10 : i32, message = "bqd,bkd->bqk"}> : () -> ()
    %cst_24 = arith.constant dense<0.000000e+00> : vector<1x8x8xf32>
    %95 = tpu.matmul %93, %94, %cst_24 {dimension_numbers = #tpu.dot_dimension_numbers<[2], [2], [1], [1], [0, 0, 0, 1, 1, 1], [0], [0]>} : vector<1x8x8xbf16>, vector<1x8x8xbf16>, vector<1x8x8xf32> -> vector<1x8x8xf32>
    "tpu.trace_stop"() : () -> ()
    %cst_25 = arith.constant 0.353553385 : f32
    %96 = vector.broadcast %cst_25 : f32 to vector<1x8x8xf32>
    %97 = arith.mulf %95, %96 : vector<1x8x8xf32>
    %98 = vector.broadcast %8 : vector<1x1x8xf32> to vector<1x8x8xf32>
    %99 = arith.addf %97, %98 : vector<1x8x8xf32>
    %cst_26 = arith.constant dense<0xFF800000> : vector<1x8xf32>
    %100 = vector.multi_reduction <maximumf>, %99, %cst_26 [2] : vector<1x8x8xf32> to vector<1x8xf32>
    %101 = vector.shape_cast %100 : vector<1x8xf32> to vector<1x8x1xf32>
    %102 = vector.broadcast %101 : vector<1x8x1xf32> to vector<1x8x8xf32>
    %103 = arith.subf %99, %102 : vector<1x8x8xf32>
    %104 = math.exp %103 : vector<1x8x8xf32>
    %cst_27 = arith.constant dense<0.000000e+00> : vector<1x8xf32>
    %105 = vector.multi_reduction <add>, %104, %cst_27 [2] : vector<1x8x8xf32> to vector<1x8xf32>
    %106 = vector.shape_cast %105 : vector<1x8xf32> to vector<1x8x1xf32>
    %107 = tpu.reciprocal %106 : vector<1x8x1xf32> -> vector<1x8x1xf32>
    %108 = vector.broadcast %107 : vector<1x8x1xf32> to vector<1x8x8xf32>
    %109 = arith.mulf %104, %108 : vector<1x8x8xf32>
    %110 = arith.truncf %109 : vector<1x8x8xf32> to vector<1x8x8xbf16>
    %111 = arith.truncf %92 : vector<1x8x8xf32> to vector<1x8x8xbf16>
    "tpu.trace_start"() <{level = 10 : i32, message = "bqk,bkd->bqd"}> : () -> ()
    %cst_28 = arith.constant dense<0.000000e+00> : vector<1x8x8xf32>
    %112 = tpu.matmul %110, %111, %cst_28 {dimension_numbers = #tpu.dot_dimension_numbers<[2], [1], [1], [2], [0, 0, 0, 1, 1, 2], [0], [0]>} : vector<1x8x8xbf16>, vector<1x8x8xbf16>, vector<1x8x8xf32> -> vector<1x8x8xf32>
    "tpu.trace_stop"() : () -> ()
    %113 = tpu.concatenate %34, %60, %86, %112 in 2 : vector<1x8x8xf32>, vector<1x8x8xf32>, vector<1x8x8xf32>, vector<1x8x8xf32> -> vector<1x8x32xf32>
    %114 = vector.shape_cast %113 : vector<1x8x32xf32> to vector<8x32xf32>
    %c0_29 = arith.constant 0 : index
    %c0_30 = arith.constant 0 : index
    %115 = vector.load %arg5[%c0_29, %c0_30] : memref<32x32xbf16, #tpu.memory_space<vmem>>, vector<32x32xbf16>
    %116 = arith.truncf %114 : vector<8x32xf32> to vector<8x32xbf16>
    %cst_31 = arith.constant dense<0.000000e+00> : vector<8x32xf32>
    %117 = tpu.matmul %116, %115, %cst_31 {dimension_numbers = #tpu.dot_dimension_numbers<[1], [0], [0], [1], [0, 0, 1, 1], [], []>} : vector<8x32xbf16>, vector<32x32xbf16>, vector<8x32xf32> -> vector<8x32xf32>
    %c0_32 = arith.constant 0 : index
    %c0_33 = arith.constant 0 : index
    %118 = vector.load %arg6[%c0_32, %c0_33] : memref<1x32xf32, #tpu.memory_space<vmem>>, vector<1x32xf32>
    %119 = vector.broadcast %118 : vector<1x32xf32> to vector<8x32xf32>
    %120 = arith.addf %117, %119 : vector<8x32xf32>
    %121 = arith.addf %120, %1 : vector<8x32xf32>
    %c0_34 = arith.constant 0 : index
    %c0_35 = arith.constant 0 : index
    %122 = vector.load %arg7[%c0_34, %c0_35] : memref<1x32xf32, #tpu.memory_space<vmem>>, vector<1x32xf32>
    %c0_36 = arith.constant 0 : index
    %c0_37 = arith.constant 0 : index
    %123 = vector.load %arg8[%c0_36, %c0_37] : memref<1x32xf32, #tpu.memory_space<vmem>>, vector<1x32xf32>
    %cst_38 = arith.constant dense<0.000000e+00> : vector<8xf32>
    %124 = vector.multi_reduction <add>, %121, %cst_38 [1] : vector<8x32xf32> to vector<8xf32>
    %125 = vector.shape_cast %124 : vector<8xf32> to vector<8x1xf32>
    %cst_39 = arith.constant 3.200000e+01 : f32
    %126 = vector.broadcast %cst_39 : f32 to vector<8x1xf32>
    %127 = arith.divf %125, %126 : vector<8x1xf32>
    %128 = vector.broadcast %127 : vector<8x1xf32> to vector<8x32xf32>
    %129 = arith.subf %121, %128 : vector<8x32xf32>
    %130 = arith.mulf %129, %129 : vector<8x32xf32>
    %cst_40 = arith.constant dense<0.000000e+00> : vector<8xf32>
    %131 = vector.multi_reduction <add>, %130, %cst_40 [1] : vector<8x32xf32> to vector<8xf32>
    %132 = vector.shape_cast %131 : vector<8xf32> to vector<8x1xf32>
    %cst_41 = arith.constant 3.200000e+01 : f32
    %133 = vector.broadcast %cst_41 : f32 to vector<8x1xf32>
    %134 = arith.divf %132, %133 : vector<8x1xf32>
    %cst_42 = arith.constant 9.99999996E-13 : f32
    %135 = vector.broadcast %cst_42 : f32 to vector<8x1xf32>
    %136 = arith.addf %134, %135 : vector<8x1xf32>
    %137 = math.rsqrt %136 : vector<8x1xf32>
    %138 = vector.broadcast %137 : vector<8x1xf32> to vector<8x32xf32>
    %139 = arith.mulf %129, %138 : vector<8x32xf32>
    %140 = vector.broadcast %122 : vector<1x32xf32> to vector<8x32xf32>
    %141 = arith.mulf %139, %140 : vector<8x32xf32>
    %142 = vector.broadcast %123 : vector<1x32xf32> to vector<8x32xf32>
    %143 = arith.addf %141, %142 : vector<8x32xf32>
    %c0_43 = arith.constant 0 : index
    %c0_44 = arith.constant 0 : index
    %144 = vector.load %arg9[%c0_43, %c0_44] : memref<32x64xbf16, #tpu.memory_space<vmem>>, vector<32x64xbf16>
    %145 = arith.truncf %143 : vector<8x32xf32> to vector<8x32xbf16>
    %cst_45 = arith.constant dense<0.000000e+00> : vector<8x64xf32>
    %146 = tpu.matmul %145, %144, %cst_45 {dimension_numbers = #tpu.dot_dimension_numbers<[1], [0], [0], [1], [0, 0, 1, 1], [], []>} : vector<8x32xbf16>, vector<32x64xbf16>, vector<8x64xf32> -> vector<8x64xf32>
    %c0_46 = arith.constant 0 : index
    %c0_47 = arith.constant 0 : index
    %147 = vector.load %arg10[%c0_46, %c0_47] : memref<1x64xf32, #tpu.memory_space<vmem>>, vector<1x64xf32>
    %148 = vector.broadcast %147 : vector<1x64xf32> to vector<8x64xf32>
    %149 = arith.addf %146, %148 : vector<8x64xf32>
    %150 = arith.mulf %149, %149 : vector<8x64xf32>
    %151 = arith.mulf %149, %150 : vector<8x64xf32>
    %cst_48 = arith.constant 4.471500e-02 : f32
    %152 = vector.broadcast %cst_48 : f32 to vector<8x64xf32>
    %153 = arith.mulf %152, %151 : vector<8x64xf32>
    %154 = arith.addf %149, %153 : vector<8x64xf32>
    %cst_49 = arith.constant 0.797884583 : f32
    %155 = vector.broadcast %cst_49 : f32 to vector<8x64xf32>
    %156 = arith.mulf %155, %154 : vector<8x64xf32>
    %157 = math.tanh %156 : vector<8x64xf32>
    %cst_50 = arith.constant 1.000000e+00 : f32
    %158 = vector.broadcast %cst_50 : f32 to vector<8x64xf32>
    %159 = arith.addf %158, %157 : vector<8x64xf32>
    %cst_51 = arith.constant 5.000000e-01 : f32
    %160 = vector.broadcast %cst_51 : f32 to vector<8x64xf32>
    %161 = arith.mulf %160, %159 : vector<8x64xf32>
    %162 = arith.mulf %149, %161 : vector<8x64xf32>
    %c0_52 = arith.constant 0 : index
    %c0_53 = arith.constant 0 : index
    %163 = vector.load %arg11[%c0_52, %c0_53] : memref<64x32xbf16, #tpu.memory_space<vmem>>, vector<64x32xbf16>
    %164 = arith.truncf %162 : vector<8x64xf32> to vector<8x64xbf16>
    %cst_54 = arith.constant dense<0.000000e+00> : vector<8x32xf32>
    %165 = tpu.matmul %164, %163, %cst_54 {dimension_numbers = #tpu.dot_dimension_numbers<[1], [0], [0], [1], [0, 0, 1, 1], [], []>} : vector<8x64xbf16>, vector<64x32xbf16>, vector<8x32xf32> -> vector<8x32xf32>
    %c0_55 = arith.constant 0 : index
    %c0_56 = arith.constant 0 : index
    %166 = vector.load %arg12[%c0_55, %c0_56] : memref<1x32xf32, #tpu.memory_space<vmem>>, vector<1x32xf32>
    %167 = vector.broadcast %166 : vector<1x32xf32> to vector<8x32xf32>
    %168 = arith.addf %165, %167 : vector<8x32xf32>
    %169 = arith.addf %168, %143 : vector<8x32xf32>
    %c0_57 = arith.constant 0 : index
    %c0_58 = arith.constant 0 : index
    %170 = vector.load %arg13[%c0_57, %c0_58] : memref<1x32xf32, #tpu.memory_space<vmem>>, vector<1x32xf32>
    %c0_59 = arith.constant 0 : index
    %c0_60 = arith.constant 0 : index
    %171 = vector.load %arg14[%c0_59, %c0_60] : memref<1x32xf32, #tpu.memory_space<vmem>>, vector<1x32xf32>
    %cst_61 = arith.constant dense<0.000000e+00> : vector<8xf32>
    %172 = vector.multi_reduction <add>, %169, %cst_61 [1] : vector<8x32xf32> to vector<8xf32>
    %173 = vector.shape_cast %172 : vector<8xf32> to vector<8x1xf32>
    %cst_62 = arith.constant 3.200000e+01 : f32
    %174 = vector.broadcast %cst_62 : f32 to vector<8x1xf32>
    %175 = arith.divf %173, %174 : vector<8x1xf32>
    %176 = vector.broadcast %175 : vector<8x1xf32> to vector<8x32xf32>
    %177 = arith.subf %169, %176 : vector<8x32xf32>
    %178 = arith.mulf %177, %177 : vector<8x32xf32>
    %cst_63 = arith.constant dense<0.000000e+00> : vector<8xf32>
    %179 = vector.multi_reduction <add>, %178, %cst_63 [1] : vector<8x32xf32> to vector<8xf32>
    %180 = vector.shape_cast %179 : vector<8xf32> to vector<8x1xf32>
    %cst_64 = arith.constant 3.200000e+01 : f32
    %181 = vector.broadcast %cst_64 : f32 to vector<8x1xf32>
    %182 = arith.divf %180, %181 : vector<8x1xf32>
    %cst_65 = arith.constant 9.99999996E-13 : f32
    %183 = vector.broadcast %cst_65 : f32 to vector<8x1xf32>
    %184 = arith.addf %182, %183 : vector<8x1xf32>
    %185 = math.rsqrt %184 : vector<8x1xf32>
    %186 = vector.broadcast %185 : vector<8x1xf32> to vector<8x32xf32>
    %187 = arith.mulf %177, %186 : vector<8x32xf32>
    %188 = vector.broadcast %170 : vector<1x32xf32> to vector<8x32xf32>
    %189 = arith.mulf %187, %188 : vector<8x32xf32>
    %190 = vector.broadcast %171 : vector<1x32xf32> to vector<8x32xf32>
    %191 = arith.addf %189, %190 : vector<8x32xf32>
    %192 = vector.shape_cast %191 : vector<8x32xf32> to vector<1x8x32xf32>
    %cst_66 = arith.constant dense<0xFF800000> : vector<1x32xf32>
    %193 = vector.multi_reduction <maximumf>, %192, %cst_66 [1] : vector<1x8x32xf32> to vector<1x32xf32>
    %194 = vector.shape_cast %193 : vector<1x32xf32> to vector<1x1x32xf32>
    %c0_67 = arith.constant 0 : index
    %c0_68 = arith.constant 0 : index
    %c0_69 = arith.constant 0 : index
    %195 = vector.load %arg15[%c0_67, %c0_68, %c0_69] : memref<1x1x32xf32, #tpu.memory_space<vmem>>, vector<1x1x32xf32>
    tpu.vector_store %arg15[%c0_67, %c0_68, %c0_69], %194 {strides = array<i32>} : memref<1x1x32xf32, #tpu.memory_space<vmem>>, vector<1x1x32xf32>,
    return
  }
  func.func @transform_0(%arg0: i32) -> (i32, i32, i32) {
    %c0_i32 = arith.constant 0 : i32
    %c0_i32_0 = arith.constant 0 : i32
    %c0_i32_1 = arith.constant 0 : i32
    return %arg0, %c0_i32, %c0_i32_0 : i32, i32, i32
  }
  func.func @transform_1(%arg0: i32) -> (i32, i32, i32) {
    %c0_i32 = arith.constant 0 : i32
    %c0_i32_0 = arith.constant 0 : i32
    %c0_i32_1 = arith.constant 0 : i32
    return %arg0, %c0_i32, %c0_i32_0 : i32, i32, i32
  }
  func.func @transform_2(%arg0: i32) -> (i32, i32) {
    %c0_i32 = arith.constant 0 : i32
    %c0_i32_0 = arith.constant 0 : i32
    %c0_i32_1 = arith.constant 0 : i32
    return %c0_i32, %c0_i32_0 : i32, i32
  }
  func.func @transform_3(%arg0: i32) -> (i32, i32) {
    %c0_i32 = arith.constant 0 : i32
    %c0_i32_0 = arith.constant 0 : i32
    %c0_i32_1 = arith.constant 0 : i32
    return %c0_i32, %c0_i32_0 : i32, i32
  }
  func.func @transform_4(%arg0: i32) -> (i32, i32) {
    %c0_i32 = arith.constant 0 : i32
    %c0_i32_0 = arith.constant 0 : i32
    %c0_i32_1 = arith.constant 0 : i32
    return %c0_i32, %c0_i32_0 : i32, i32
  }
  func.func @transform_5(%arg0: i32) -> (i32, i32) {
    %c0_i32 = arith.constant 0 : i32
    %c0_i32_0 = arith.constant 0 : i32
    %c0_i32_1 = arith.constant 0 : i32
    return %c0_i32, %c0_i32_0 : i32, i32
  }
  func.func @transform_6(%arg0: i32) -> (i32, i32) {
    %c0_i32 = arith.constant 0 : i32
    %c0_i32_0 = arith.constant 0 : i32
    %c0_i32_1 = arith.constant 0 : i32
    return %c0_i32, %c0_i32_0 : i32, i32
  }
  func.func @transform_7(%arg0: i32) -> (i32, i32) {
    %c0_i32 = arith.constant 0 : i32
    %c0_i32_0 = arith.constant 0 : i32
    %c0_i32_1 = arith.constant 0 : i32
    return %c0_i32, %c0_i32_0 : i32, i32
  }
  func.func @transform_8(%arg0: i32) -> (i32, i32) {
    %c0_i32 = arith.constant 0 : i32
    %c0_i32_0 = arith.constant 0 : i32
    %c0_i32_1 = arith.constant 0 : i32
    return %c0_i32, %c0_i32_0 : i32, i32
  }
  func.func @transform_9(%arg0: i32) -> (i32, i32) {
    %c0_i32 = arith.constant 0 : i32
    %c0_i32_0 = arith.constant 0 : i32
    %c0_i32_1 = arith.constant 0 : i32
    return %c0_i32, %c0_i32_0 : i32, i32
  }
  func.func @transform_10(%arg0: i32) -> (i32, i32) {
    %c0_i32 = arith.constant 0 : i32
    %c0_i32_0 = arith.constant 0 : i32
    %c0_i32_1 = arith.constant 0 : i32
    return %c0_i32, %c0_i32_0 : i32, i32
  }
  func.func @transform_11(%arg0: i32) -> (i32, i32) {
    %c0_i32 = arith.constant 0 : i32
    %c0_i32_0 = arith.constant 0 : i32
    %c0_i32_1 = arith.constant 0 : i32
    return %c0_i32, %c0_i32_0 : i32, i32
  }
  func.func @transform_12(%arg0: i32) -> (i32, i32) {
    %c0_i32 = arith.constant 0 : i32
    %c0_i32_0 = arith.constant 0 : i32
    %c0_i32_1 = arith.constant 0 : i32
    return %c0_i32, %c0_i32_0 : i32, i32
  }
  func.func @transform_13(%arg0: i32) -> (i32, i32) {
    %c0_i32 = arith.constant 0 : i32
    %c0_i32_0 = arith.constant 0 : i32
    %c0_i32_1 = arith.constant 0 : i32
    return %c0_i32, %c0_i32_0 : i32, i32
  }
  func.func @transform_14(%arg0: i32) -> (i32, i32, i32) {
    %c0_i32 = arith.constant 0 : i32
    %c0_i32_0 = arith.constant 0 : i32
    %c0_i32_1 = arith.constant 0 : i32
    return %arg0, %c0_i32, %c0_i32_0 : i32, i32, i32
  }
}

</mosaic_0001>

<llo_original>
// kernel: tpu_custom_call.1
$region0: #{tpu_custom_call.1}
  #allocation0 [shape = 'u32[]', space=smem, size = 0x4, offset = 0x4, fixed_abs, tag = 'smem constant byte address 0x4 - core index']
  #allocation1 [shape = 'u32[72,128]{1,0:T(1,128)}', space=vmem, size = 0x9000, scoped, tag = 'internal scratch']
  %s0 = inlined_call_operand.vmem [shape: f32[2,8,32], index: 0, kind: input, shape index: {}]
  %s1 = inlined_call_operand.hbm [shape: f32[2,1,8], index: 1, kind: input, shape index: {}]
  %s2 = inlined_call_operand.vmem [shape: bf16[32,96], index: 2, kind: input, shape index: {}]
  %s3 = inlined_call_operand.vmem [shape: f32[1,96], index: 3, kind: input, shape index: {}]
  %s4 = inlined_call_operand.vmem [shape: bf16[32,32], index: 4, kind: input, shape index: {}]
  %s5 = inlined_call_operand.vmem [shape: f32[1,32], index: 5, kind: input, shape index: {}]
  %s6 = inlined_call_operand.vmem [shape: f32[1,32], index: 6, kind: input, shape index: {}]
  %s7 = inlined_call_operand.vmem [shape: f32[1,32], index: 7, kind: input, shape index: {}]
  %s8 = inlined_call_operand.hbm [shape: bf16[32,64], index: 8, kind: input, shape index: {}]
  %s9 = inlined_call_operand.vmem [shape: f32[1,64], index: 9, kind: input, shape index: {}]
  %s10 = inlined_call_operand.vmem [shape: bf16[64,32], index: 10, kind: input, shape index: {}]
  %s11 = inlined_call_operand.vmem [shape: f32[1,32], index: 11, kind: input, shape index: {}]
  %s12 = inlined_call_operand.vmem [shape: f32[1,32], index: 12, kind: input, shape index: {}]
  %s13 = inlined_call_operand.vmem [shape: f32[1,32], index: 13, kind: input, shape index: {}]
  %s14 = inlined_call_operand.hbm [shape: f32[2,1,32], index: 14, kind: output, shape index: {}]
  %s15 = sld [smem:[#allocation0]]
  $region97: #{tpu_custom_call.1} parent=0
    _
  %s17 = ssub.s32 1, %s15
  %s18 = scalar_select 0, %s17, %s15
  $region1: #{tpu_custom_call.1} parent=0
    #allocation2 [shape = 'u8[1024]{0}', space=vmem, size = 0x400, scoped, tag = 'input window, operand 1']
    #allocation3 [shape = 's32[2]{0}', space=sflag, size = 0x8, scoped, tag = 'scoped memory for tpu_custom_call.1']
    #allocation4 [shape = 's32[2]{0}', space=sflag, size = 0x8, scoped, tag = 'scoped memory for tpu_custom_call.1']
    #allocation5 [shape = 'u8[8192]{0}', space=vmem, size = 0x2000, scoped, tag = 'input window, operand 8, single buffered']
    #allocation6 [shape = 's32[1]{0}', space=sflag, size = 0x4, scoped, tag = 'scoped memory for tpu_custom_call.1']
    #allocation7 [shape = 'u8[1024]{0}', space=vmem, size = 0x400, scoped, tag = 'output window, operand 0']
    %19 = vsyncpa [#allocation3], 0
    %s20 = scalar_lea.sflag [#allocation3], 1
    %21 = vsyncpa %s20, 0
    %22 = vsyncpa [#allocation6], 0
    %23 = vsyncpa [#allocation4], 0
    %s24 = scalar_lea.sflag [#allocation4], 1
    %25 = vsyncpa %s24, 0
    loop: start=0, step=1, limit=4
    $region2: #{tpu_custom_call.1} parent=1 // loop_pre_header
      _
    $region3: #{tpu_custom_call.1} parent=1 // loop_header
      %s27 = sphi 0, %s31
      %p28 = scmp.ge.s32.totalorder %s27, 4
      %s37 = sphi 0, %s39
      %s40 = sphi 0, %s37
      %s41 = sphi 0, %s40
      %s57 = sphi 0, %s41
      %s63 = sphi 0, %s65
      %s66 = sphi 0, %s63
      %s67 = sphi 0, %s66
      %s83 = sphi 0, %s67
      %s87 = sphi 0, %s87
      %s89 = sphi 0, %s87
      %s90 = sphi 0, %s89
      %s104 = sphi 0, %s90
      %s108 = sphi 0, %s108
      %s110 = sphi 0, %s108
      %s111 = sphi 0, %s110
      %s125 = sphi 0, %s111
      %s129 = sphi 0, %s129
      %s131 = sphi 0, %s129
      %s132 = sphi 0, %s131
      %s146 = sphi 0, %s132
      %s150 = sphi 0, %s150
      %s152 = sphi 0, %s150
      %s153 = sphi 0, %s152
      %s167 = sphi 0, %s153
      %s171 = sphi 0, %s171
      %s173 = sphi 0, %s171
      %s174 = sphi 0, %s173
      %s188 = sphi 0, %s174
      %s192 = sphi 0, %s192
      %s194 = sphi 0, %s192
      %s195 = sphi 0, %s194
      %s209 = sphi 0, %s195
      %s213 = sphi 0, %s213
      %s215 = sphi 0, %s213
      %s216 = sphi 0, %s215
      %s230 = sphi 0, %s216
      %s234 = sphi 0, %s234
      %s236 = sphi 0, %s234
      %s237 = sphi 0, %s236
      %s251 = sphi 0, %s237
      %s255 = sphi 0, %s255
      %s257 = sphi 0, %s255
      %s258 = sphi 0, %s257
      %s272 = sphi 0, %s258
      %s276 = sphi 0, %s276
      %s278 = sphi 0, %s276
      %s279 = sphi 0, %s278
      %s293 = sphi 0, %s279
      %s297 = sphi 0, %s297
      %s299 = sphi 0, %s297
      %s300 = sphi 0, %s299
      %s314 = sphi 0, %s300
      %s318 = sphi 0, %s318
      %s320 = sphi 0, %s318
      %s321 = sphi 0, %s320
      %s335 = sphi 0, %s321
      %s341 = sphi 0, %s343
      %s344 = sphi 0, %s341
      %s345 = sphi 0, %s344
      %s361 = sphi 0, %s345
    $region4: #{tpu_custom_call.1} parent=1 // loop_header_branch
      %30 = sbr.rel (%p28) target = $region8
    $region5: #{tpu_custom_call.1} parent=1 // loop_body
      %s32 = ssub.s32 %s27, 1
      %s33 = ssub.s32 %s27, 2
      %s34 = sadd.s32 %s27, 1
      %s35 = ssub.s32 %s27, %s34
      %p36 = scmp.eq.s32.totalorder %s35, 0
      %s38 = sadd.s32 %s37, 1
      %s39 = scalar_select %p36, %s37, %s38
      %p42 = pneg %p36
      %p43 = scmp.eq.s32.totalorder %s27, 1
      %p44 = por %p42, %p43
      %p45 = scmp.ne.s32.totalorder %s37, %s40
      %p46 = scmp.eq.s32.totalorder %s27, 0
      %p47 = por %p45, %p46
      %p48 = scmp.ne.s32.totalorder %s37, %s40
      %p49 = scmp.eq.s32.totalorder %s32, 1
      %p50 = por %p48, %p49
      %p51 = scmp.ne.s32.totalorder %s40, %s41
      %p52 = scmp.eq.s32.totalorder %s32, 0
      %p53 = por %p51, %p52
      %p54 = scmp.ne.s32.totalorder %s40, %s41
      %p55 = scmp.eq.s32.totalorder %s33, 1
      %p56 = por %p54, %p55
      %p58 = scmp.ne.s32.totalorder %s41, %s57
      %p59 = scmp.eq.s32.totalorder %s33, 0
      %p60 = por %p58, %p59
      %s61 = ssub.s32 %s27, %s34
      %p62 = scmp.eq.s32.totalorder %s61, 0
      %s64 = sadd.s32 %s63, 1
      %s65 = scalar_select %p62, %s63, %s64
      %p68 = pneg %p62
      %p69 = scmp.eq.s32.totalorder %s27, 1
      %p70 = por %p68, %p69
      %p71 = scmp.ne.s32.totalorder %s63, %s66
      %p72 = scmp.eq.s32.totalorder %s27, 0
      %p73 = por %p71, %p72
      %p74 = scmp.ne.s32.totalorder %s63, %s66
      %p75 = scmp.eq.s32.totalorder %s32, 1
      %p76 = por %p74, %p75
      %p77 = scmp.ne.s32.totalorder %s66, %s67
      %p78 = scmp.eq.s32.totalorder %s32, 0
      %p79 = por %p77, %p78
      %p80 = scmp.ne.s32.totalorder %s66, %s67
      %p81 = scmp.eq.s32.totalorder %s33, 1
      %p82 = por %p80, %p81
      %p84 = scmp.ne.s32.totalorder %s67, %s83
      %p85 = scmp.eq.s32.totalorder %s33, 0
      %p86 = por %p84, %p85
      %s88 = sadd.s32 %s87, 1
      %p91 = scmp.eq.s32.totalorder %s27, 1
      %p92 = scmp.ne.s32.totalorder %s87, %s89
      %p93 = scmp.eq.s32.totalorder %s27, 0
      %p94 = por %p92, %p93
      %p95 = scmp.ne.s32.totalorder %s87, %s89
      %p96 = scmp.eq.s32.totalorder %s32, 1
      %p97 = por %p95, %p96
      %p98 = scmp.ne.s32.totalorder %s89, %s90
      %p99 = scmp.eq.s32.totalorder %s32, 0
      %p100 = por %p98, %p99
      %p101 = scmp.ne.s32.totalorder %s89, %s90
      %p102 = scmp.eq.s32.totalorder %s33, 1
      %p103 = por %p101, %p102
      %p105 = scmp.ne.s32.totalorder %s90, %s104
      %p106 = scmp.eq.s32.totalorder %s33, 0
      %p107 = por %p105, %p106
      %s109 = sadd.s32 %s108, 1
      %p112 = scmp.eq.s32.totalorder %s27, 1
      %p113 = scmp.ne.s32.totalorder %s108, %s110
      %p114 = scmp.eq.s32.totalorder %s27, 0
      %p115 = por %p113, %p114
      %p116 = scmp.ne.s32.totalorder %s108, %s110
      %p117 = scmp.eq.s32.totalorder %s32, 1
      %p118 = por %p116, %p117
      %p119 = scmp.ne.s32.totalorder %s110, %s111
      %p120 = scmp.eq.s32.totalorder %s32, 0
      %p121 = por %p119, %p120
      %p122 = scmp.ne.s32.totalorder %s110, %s111
      %p123 = scmp.eq.s32.totalorder %s33, 1
      %p124 = por %p122, %p123
      %p126 = scmp.ne.s32.totalorder %s111, %s125
      %p127 = scmp.eq.s32.totalorder %s33, 0
      %p128 = por %p126, %p127
      %s130 = sadd.s32 %s129, 1
      %p133 = scmp.eq.s32.totalorder %s27, 1
      %p134 = scmp.ne.s32.totalorder %s129, %s131
      %p135 = scmp.eq.s32.totalorder %s27, 0
      %p136 = por %p134, %p135
      %p137 = scmp.ne.s32.totalorder %s129, %s131
      %p138 = scmp.eq.s32.totalorder %s32, 1
      %p139 = por %p137, %p138
      %p140 = scmp.ne.s32.totalorder %s131, %s132
      %p141 = scmp.eq.s32.totalorder %s32, 0
      %p142 = por %p140, %p141
      %p143 = scmp.ne.s32.totalorder %s131, %s132
      %p144 = scmp.eq.s32.totalorder %s33, 1
      %p145 = por %p143, %p144
      %p147 = scmp.ne.s32.totalorder %s132, %s146
      %p148 = scmp.eq.s32.totalorder %s33, 0
      %p149 = por %p147, %p148
      %s151 = sadd.s32 %s150, 1
      %p154 = scmp.eq.s32.totalorder %s27, 1
      %p155 = scmp.ne.s32.totalorder %s150, %s152
      %p156 = scmp.eq.s32.totalorder %s27, 0
      %p157 = por %p155, %p156
      %p158 = scmp.ne.s32.totalorder %s150, %s152
      %p159 = scmp.eq.s32.totalorder %s32, 1
      %p160 = por %p158, %p159
      %p161 = scmp.ne.s32.totalorder %s152, %s153
      %p162 = scmp.eq.s32.totalorder %s32, 0
      %p163 = por %p161, %p162
      %p164 = scmp.ne.s32.totalorder %s152, %s153
      %p165 = scmp.eq.s32.totalorder %s33, 1
      %p166 = por %p164, %p165
      %p168 = scmp.ne.s32.totalorder %s153, %s167
      %p169 = scmp.eq.s32.totalorder %s33, 0
      %p170 = por %p168, %p169
      %s172 = sadd.s32 %s171, 1
      %p175 = scmp.eq.s32.totalorder %s27, 1
      %p176 = scmp.ne.s32.totalorder %s171, %s173
      %p177 = scmp.eq.s32.totalorder %s27, 0
      %p178 = por %p176, %p177
      %p179 = scmp.ne.s32.totalorder %s171, %s173
      %p180 = scmp.eq.s32.totalorder %s32, 1
      %p181 = por %p179, %p180
      %p182 = scmp.ne.s32.totalorder %s173, %s174
      %p183 = scmp.eq.s32.totalorder %s32, 0
      %p184 = por %p182, %p183
      %p185 = scmp.ne.s32.totalorder %s173, %s174
      %p186 = scmp.eq.s32.totalorder %s33, 1
      %p187 = por %p185, %p186
      %p189 = scmp.ne.s32.totalorder %s174, %s188
      %p190 = scmp.eq.s32.totalorder %s33, 0
      %p191 = por %p189, %p190
      %s193 = sadd.s32 %s192, 1
      %p196 = scmp.eq.s32.totalorder %s27, 1
      %p197 = scmp.ne.s32.totalorder %s192, %s194
      %p198 = scmp.eq.s32.totalorder %s27, 0
      %p199 = por %p197, %p198
      %p200 = scmp.ne.s32.totalorder %s192, %s194
      %p201 = scmp.eq.s32.totalorder %s32, 1
      %p202 = por %p200, %p201
      %p203 = scmp.ne.s32.totalorder %s194, %s195
      %p204 = scmp.eq.s32.totalorder %s32, 0
      %p205 = por %p203, %p204
      %p206 = scmp.ne.s32.totalorder %s194, %s195
      %p207 = scmp.eq.s32.totalorder %s33, 1
      %p208 = por %p206, %p207
      %p210 = scmp.ne.s32.totalorder %s195, %s209
      %p211 = scmp.eq.s32.totalorder %s33, 0
      %p212 = por %p210, %p211
      %s214 = sadd.s32 %s213, 1
      %p217 = scmp.eq.s32.totalorder %s27, 1
      %p218 = scmp.ne.s32.totalorder %s213, %s215
      %p219 = scmp.eq.s32.totalorder %s27, 0
      %p220 = por %p218, %p219
      %p221 = scmp.ne.s32.totalorder %s213, %s215
      %p222 = scmp.eq.s32.totalorder %s32, 1
      %p223 = por %p221, %p222
      %p224 = scmp.ne.s32.totalorder %s215, %s216
      %p225 = scmp.eq.s32.totalorder %s32, 0
      %p226 = por %p224, %p225
      %p227 = scmp.ne.s32.totalorder %s215, %s216
      %p228 = scmp.eq.s32.totalorder %s33, 1
      %p229 = por %p227, %p228
      %p231 = scmp.ne.s32.totalorder %s216, %s230
      %p232 = scmp.eq.s32.totalorder %s33, 0
      %p233 = por %p231, %p232
      %s235 = sadd.s32 %s234, 1
      %p238 = scmp.eq.s32.totalorder %s27, 1
      %p239 = scmp.ne.s32.totalorder %s234, %s236
      %p240 = scmp.eq.s32.totalorder %s27, 0
      %p241 = por %p239, %p240
      %p242 = scmp.ne.s32.totalorder %s234, %s236
      %p243 = scmp.eq.s32.totalorder %s32, 1
      %p244 = por %p242, %p243
      %p245 = scmp.ne.s32.totalorder %s236, %s237
      %p246 = scmp.eq.s32.totalorder %s32, 0
      %p247 = por %p245, %p246
      %p248 = scmp.ne.s32.totalorder %s236, %s237
      %p249 = scmp.eq.s32.totalorder %s33, 1
      %p250 = por %p248, %p249
      %p252 = scmp.ne.s32.totalorder %s237, %s251
      %p253 = scmp.eq.s32.totalorder %s33, 0
      %p254 = por %p252, %p253
      %s256 = sadd.s32 %s255, 1
      %p259 = scmp.eq.s32.totalorder %s27, 1
      %p260 = scmp.ne.s32.totalorder %s255, %s257
      %p261 = scmp.eq.s32.totalorder %s27, 0
      %p262 = por %p260, %p261
      %p263 = scmp.ne.s32.totalorder %s255, %s257
      %p264 = scmp.eq.s32.totalorder %s32, 1
      %p265 = por %p263, %p264
      %p266 = scmp.ne.s32.totalorder %s257, %s258
      %p267 = scmp.eq.s32.totalorder %s32, 0
      %p268 = por %p266, %p267
      %p269 = scmp.ne.s32.totalorder %s257, %s258
      %p270 = scmp.eq.s32.totalorder %s33, 1
      %p271 = por %p269, %p270
      %p273 = scmp.ne.s32.totalorder %s258, %s272
      %p274 = scmp.eq.s32.totalorder %s33, 0
      %p275 = por %p273, %p274
      %s277 = sadd.s32 %s276, 1
      %p280 = scmp.eq.s32.totalorder %s27, 1
      %p281 = scmp.ne.s32.totalorder %s276, %s278
      %p282 = scmp.eq.s32.totalorder %s27, 0
      %p283 = por %p281, %p282
      %p284 = scmp.ne.s32.totalorder %s276, %s278
      %p285 = scmp.eq.s32.totalorder %s32, 1
      %p286 = por %p284, %p285
      %p287 = scmp.ne.s32.totalorder %s278, %s279
      %p288 = scmp.eq.s32.totalorder %s32, 0
      %p289 = por %p287, %p288
      %p290 = scmp.ne.s32.totalorder %s278, %s279
      %p291 = scmp.eq.s32.totalorder %s33, 1
      %p292 = por %p290, %p291
      %p294 = scmp.ne.s32.totalorder %s279, %s293
      %p295 = scmp.eq.s32.totalorder %s33, 0
      %p296 = por %p294, %p295
      %s298 = sadd.s32 %s297, 1
      %p301 = scmp.eq.s32.totalorder %s27, 1
      %p302 = scmp.ne.s32.totalorder %s297, %s299
      %p303 = scmp.eq.s32.totalorder %s27, 0
      %p304 = por %p302, %p303
      %p305 = scmp.ne.s32.totalorder %s297, %s299
      %p306 = scmp.eq.s32.totalorder %s32, 1
      %p307 = por %p305, %p306
      %p308 = scmp.ne.s32.totalorder %s299, %s300
      %p309 = scmp.eq.s32.totalorder %s32, 0
      %p310 = por %p308, %p309
      %p311 = scmp.ne.s32.totalorder %s299, %s300
      %p312 = scmp.eq.s32.totalorder %s33, 1
      %p313 = por %p311, %p312
      %p315 = scmp.ne.s32.totalorder %s300, %s314
      %p316 = scmp.eq.s32.totalorder %s33, 0
      %p317 = por %p315, %p316
      %s319 = sadd.s32 %s318, 1
      %p322 = scmp.eq.s32.totalorder %s27, 1
      %p323 = scmp.ne.s32.totalorder %s318, %s320
      %p324 = scmp.eq.s32.totalorder %s27, 0
      %p325 = por %p323, %p324
      %p326 = scmp.ne.s32.totalorder %s318, %s320
      %p327 = scmp.eq.s32.totalorder %s32, 1
      %p328 = por %p326, %p327
      %p329 = scmp.ne.s32.totalorder %s320, %s321
      %p330 = scmp.eq.s32.totalorder %s32, 0
      %p331 = por %p329, %p330
      %p332 = scmp.ne.s32.totalorder %s320, %s321
      %p333 = scmp.eq.s32.totalorder %s33, 1
      %p334 = por %p332, %p333
      %p336 = scmp.ne.s32.totalorder %s321, %s335
      %p337 = scmp.eq.s32.totalorder %s33, 0
      %p338 = por %p336, %p337
      %s339 = ssub.s32 %s27, %s34
      %p340 = scmp.eq.s32.totalorder %s339, 0
      %s342 = sadd.s32 %s341, 1
      %s343 = scalar_select %p340, %s341, %s342
      %p346 = pneg %p340
      %p347 = scmp.eq.s32.totalorder %s27, 1
      %p348 = por %p346, %p347
      %p349 = scmp.ne.s32.totalorder %s341, %s344
      %p350 = scmp.eq.s32.totalorder %s27, 0
      %p351 = por %p349, %p350
      %p352 = scmp.ne.s32.totalorder %s341, %s344
      %p353 = scmp.eq.s32.totalorder %s32, 1
      %p354 = por %p352, %p353
      %p355 = scmp.ne.s32.totalorder %s344, %s345
      %p356 = scmp.eq.s32.totalorder %s32, 0
      %p357 = por %p355, %p356
      %p358 = scmp.ne.s32.totalorder %s344, %s345
      %p359 = scmp.eq.s32.totalorder %s33, 1
      %p360 = por %p358, %p359
      %p362 = scmp.ne.s32.totalorder %s345, %s361
      %p363 = scmp.eq.s32.totalorder %s33, 0
      %p364 = por %p362, %p363
      %p365 = scmp.le.s32.totalorder 1, %s27
      %p366 = scmp.lt.s32.totalorder %s27, 3
      %p367 = pnand %p365, %p366
      %p368 = pneg %p367
      // Predicated region
      $region9: #{tpu_custom_call.1} parent=5 // pred_check
        _
      $region10: #{tpu_custom_call.1} parent=5 // pred_check_branch
        %370 = sbr.rel (%p367) target = $region12
      $region11: #{tpu_custom_call.1} parent=5 // pred_region
        %s371 = ssub.s32 %s27, 1
        // Predicated region
        $region13: #{tpu_custom_call.1} parent=11 // pred_check
          %p372 = pneg %p100
        $region14: #{tpu_custom_call.1} parent=11 // pred_check_branch
          %374 = sbr.rel (%p372) target = $region16
        $region15: #{tpu_custom_call.1} parent=11 // pred_region
          _
        $region16: #{tpu_custom_call.1} parent=11 // pred_fallthru
          _
        // Predicated region
        $region17: #{tpu_custom_call.1} parent=11 // pred_check
          %p375 = pneg %p121
        $region18: #{tpu_custom_call.1} parent=11 // pred_check_branch
          %377 = sbr.rel (%p375) target = $region20
        $region19: #{tpu_custom_call.1} parent=11 // pred_region
          _
        $region20: #{tpu_custom_call.1} parent=11 // pred_fallthru
          _
        // Predicated region
        $region21: #{tpu_custom_call.1} parent=11 // pred_check
          %p378 = pneg %p142
        $region22: #{tpu_custom_call.1} parent=11 // pred_check_branch
          %380 = sbr.rel (%p378) target = $region24
        $region23: #{tpu_custom_call.1} parent=11 // pred_region
          _
        $region24: #{tpu_custom_call.1} parent=11 // pred_fallthru
          _
        // Predicated region
        $region25: #{tpu_custom_call.1} parent=11 // pred_check
          %p381 = pneg %p163
        $region26: #{tpu_custom_call.1} parent=11 // pred_check_branch
          %383 = sbr.rel (%p381) target = $region28
        $region27: #{tpu_custom_call.1} parent=11 // pred_region
          _
        $region28: #{tpu_custom_call.1} parent=11 // pred_fallthru
          _
        // Predicated region
        $region29: #{tpu_custom_call.1} parent=11 // pred_check
          %p384 = pneg %p184
        $region30: #{tpu_custom_call.1} parent=11 // pred_check_branch
          %386 = sbr.rel (%p384) target = $region32
        $region31: #{tpu_custom_call.1} parent=11 // pred_region
          _
        $region32: #{tpu_custom_call.1} parent=11 // pred_fallthru
          _
        // Predicated region
        $region33: #{tpu_custom_call.1} parent=11 // pred_check
          %p387 = pneg %p205
        $region34: #{tpu_custom_call.1} parent=11 // pred_check_branch
          %389 = sbr.rel (%p387) target = $region36
        $region35: #{tpu_custom_call.1} parent=11 // pred_region
          _
        $region36: #{tpu_custom_call.1} parent=11 // pred_fallthru
          _
        // Predicated region
        $region37: #{tpu_custom_call.1} parent=11 // pred_check
          %p390 = pneg %p226
        $region38: #{tpu_custom_call.1} parent=11 // pred_check_branch
          %392 = sbr.rel (%p390) target = $region40
        $region39: #{tpu_custom_call.1} parent=11 // pred_region
          %394 = vsyncadd [#allocation6], 0
          %s395 = sshll.u32 %s8, 4
          %s396 = int_to_ptr.hbm [resolvable:$true] %s395
          %s397 = sshll.u32 [#allocation5], 4
          %s398 = int_to_ptr.vmem [resolvable:$true] %s397
          %403 = dma.hbm_to_vmem [thread:$0]  %s396, 256, %s398, [#allocation6], 64, 64, 4
        $region40: #{tpu_custom_call.1} parent=11 // pred_fallthru
          _
        // Predicated region
        $region41: #{tpu_custom_call.1} parent=11 // pred_check
          %p404 = pneg %p247
        $region42: #{tpu_custom_call.1} parent=11 // pred_check_branch
          %406 = sbr.rel (%p404) target = $region44
        $region43: #{tpu_custom_call.1} parent=11 // pred_region
          _
        $region44: #{tpu_custom_call.1} parent=11 // pred_fallthru
          _
        // Predicated region
        $region45: #{tpu_custom_call.1} parent=11 // pred_check
          %p407 = pneg %p268
        $region46: #{tpu_custom_call.1} parent=11 // pred_check_branch
          %409 = sbr.rel (%p407) target = $region48
        $region47: #{tpu_custom_call.1} parent=11 // pred_region
          _
        $region48: #{tpu_custom_call.1} parent=11 // pred_fallthru
          _
        // Predicated region
        $region49: #{tpu_custom_call.1} parent=11 // pred_check
          %p410 = pneg %p289
        $region50: #{tpu_custom_call.1} parent=11 // pred_check_branch
          %412 = sbr.rel (%p410) target = $region52
        $region51: #{tpu_custom_call.1} parent=11 // pred_region
          _
        $region52: #{tpu_custom_call.1} parent=11 // pred_fallthru
          _
        // Predicated region
        $region53: #{tpu_custom_call.1} parent=11 // pred_check
          %p413 = pneg %p310
        $region54: #{tpu_custom_call.1} parent=11 // pred_check_branch
          %415 = sbr.rel (%p413) target = $region56
        $region55: #{tpu_custom_call.1} parent=11 // pred_region
          _
        $region56: #{tpu_custom_call.1} parent=11 // pred_fallthru
          _
        // Predicated region
        $region57: #{tpu_custom_call.1} parent=11 // pred_check
          %p416 = pneg %p331
        $region58: #{tpu_custom_call.1} parent=11 // pred_check_branch
          %418 = sbr.rel (%p416) target = $region60
        $region59: #{tpu_custom_call.1} parent=11 // pred_region
          _
        $region60: #{tpu_custom_call.1} parent=11 // pred_fallthru
          _
      $region12: #{tpu_custom_call.1} parent=5 // pred_fallthru
        _
      %p419 = scmp.lt.s32.totalorder %s27, 2
      // Predicated region
      $region61: #{tpu_custom_call.1} parent=5 // pred_check
        %p420 = pneg %p419
      $region62: #{tpu_custom_call.1} parent=5 // pred_check_branch
        %422 = sbr.rel (%p420) target = $region64
      $region63: #{tpu_custom_call.1} parent=5 // pred_region
        // Predicated region
        $region65: #{tpu_custom_call.1} parent=63 // pred_check
          %p423 = pneg %p47
        $region66: #{tpu_custom_call.1} parent=63 // pred_check_branch
          %425 = sbr.rel (%p423) target = $region68
        $region67: #{tpu_custom_call.1} parent=63 // pred_region
          %p426 = scmp.lt.s32.totalorder %s27, 1
          %s427 = scalar_select %p426, %s27, 1
          %s428 = smul.addr %s427, 8
          %s429 = scalar_lea.vmem %s0, %s428
        $region68: #{tpu_custom_call.1} parent=63 // pred_fallthru
          _
        // Predicated region
        $region69: #{tpu_custom_call.1} parent=63 // pred_check
          %p430 = pneg %p73
        $region70: #{tpu_custom_call.1} parent=63 // pred_check_branch
          %432 = sbr.rel (%p430) target = $region72
        $region71: #{tpu_custom_call.1} parent=63 // pred_region
          %s433 = sand.u32 %s63, 1
          %s434 = scalar_lea.sflag [#allocation3], %s433
          %s435 = sand.u32 %s63, 1
          %s436 = scalar_lea.vmem [#allocation2], %s435
          %438 = vsyncadd %s434, 0
          %s439 = scalar_lea.hbm %s1, %s27
          %s441 = sshll.u32 %s439, 4
          %s442 = int_to_ptr.hbm [resolvable:$true] %s441
          %s443 = sshll.u32 %s436, 4
          %s444 = int_to_ptr.vmem [resolvable:$true] %s443
          %446 = dma.hbm_to_vmem [thread:$0]  %s442, 16, %s444, %s434
        $region72: #{tpu_custom_call.1} parent=63 // pred_fallthru
          _
      $region64: #{tpu_custom_call.1} parent=5 // pred_fallthru
        _
      %p447 = scmp.le.s32.totalorder 1, %s27
      %p448 = scmp.lt.s32.totalorder %s27, 3
      %p449 = pnand %p447, %p448
      %p450 = pneg %p449
      // Predicated region
      $region73: #{tpu_custom_call.1} parent=5 // pred_check
        _
      $region74: #{tpu_custom_call.1} parent=5 // pred_check_branch
        %452 = sbr.rel (%p449) target = $region76
      $region75: #{tpu_custom_call.1} parent=5 // pred_region
        %s453 = ssub.s32 %s27, 1
        %s454 = sand.u32 %s66, 1
        %s455 = scalar_lea.sflag [#allocation3], %s454
        %s456 = sand.u32 %s66, 1
        %s457 = scalar_lea.vmem [#allocation2], %s456
        // Predicated region
        $region77: #{tpu_custom_call.1} parent=75 // pred_check
          %p458 = pneg %p79
        $region78: #{tpu_custom_call.1} parent=75 // pred_check_branch
          %460 = sbr.rel (%p458) target = $region80
        $region79: #{tpu_custom_call.1} parent=75 // pred_region
          %462 = dma.done %s455, 16
        $region80: #{tpu_custom_call.1} parent=75 // pred_fallthru
          _
        // Predicated region
        $region81: #{tpu_custom_call.1} parent=75 // pred_check
          %p463 = pneg %p226
        $region82: #{tpu_custom_call.1} parent=75 // pred_check_branch
          %465 = sbr.rel (%p463) target = $region84
        $region83: #{tpu_custom_call.1} parent=75 // pred_region
          %467 = dma.done [#allocation6], 256
        $region84: #{tpu_custom_call.1} parent=75 // pred_fallthru
          _
        %p468 = scmp.lt.s32.totalorder %s32, 1
        %s469 = scalar_select %p468, %s32, 1
        %s470 = smul.addr %s469, 8
        %s471 = scalar_lea.vmem %s0, %s470
        %p472 = pneg %p53
        %p473 = pneg %p50
        %s474 = sand.u32 %s66, 1
        %s475 = scalar_lea.sflag [#allocation3], %s474
        %s476 = sand.u32 %s66, 1
        %s477 = scalar_lea.vmem [#allocation2], %s476
        %p478 = pneg %p79
        %p479 = pneg %p76
        %p480 = pneg %p100
        %p481 = pneg %p97
        %p482 = pneg %p121
        %p483 = pneg %p118
        %p484 = pneg %p142
        %p485 = pneg %p139
        %p486 = pneg %p163
        %p487 = pneg %p160
        %p488 = pneg %p184
        %p489 = pneg %p181
        %p490 = pneg %p205
        %p491 = pneg %p202
        %p492 = pneg %p226
        %p493 = pneg %p223
        %p494 = pneg %p247
        %p495 = pneg %p244
        %p496 = pneg %p268
        %p497 = pneg %p265
        %p498 = pneg %p289
        %p499 = pneg %p286
        %p500 = pneg %p310
        %p501 = pneg %p307
        %p502 = pneg %p331
        %p503 = pneg %p328
        %p504 = pneg %p357
        %p505 = pneg %p354
        %s506 = sand.u32 %s344, 1
        %s507 = scalar_lea.sflag [#allocation4], %s506
        %s508 = sand.u32 %s344, 1
        %s509 = scalar_lea.vmem [#allocation7], %s508
        %p510 = scmp.lt.s32.totalorder %s32, 1
        %s511 = scalar_select %p510, %s32, 1
        %s512 = smul.addr %s511, 8
        %s513 = scalar_lea.vmem %s0, %s512
        %v515 = vld [vmem:[%s513] sm:$0xff]
        %v516 = vld [vmem:[%s2] sm:$0xf]
        %v517 = vld [vmem:[%s2 + $0x4] sm:$0xf]
        %v518 = vld [vmem:[%s2 + $0x8] sm:$0xf]
        %v519 = vld [vmem:[%s2 + $0xc] sm:$0xf]
        %v520 = vpack.c.bf16 %v515, %v515
        %v521 = vld [vmem:[%s3] sm:$0x1]
        %v523 = vperm.slane %v521, 0
        %v529 = vunpack.c.l.b16 %v516
        %v530 = vunpack.c.l.b16 %v517
        %v531 = vunpack.c.l.b16 %v518
        %v532 = vunpack.c.l.b16 %v519
        %v533 = vpack.c.b16 %v530, %v529
        %v534 = vpack.c.b16 %v532, %v531
        %vm537 = vcmask 261120
        %v539 = vsel %vm537, %v520, 0
        %541 = vmatpush.bf16.msra.mxu0 0
        %542 = vmatpush.bf16.msra.mxu0 0
        %543 = vmatpush.bf16.msra.mxu0 0
        %544 = vmatpush.bf16.msra.mxu0 0
        %545 = vmatpush.bf16.msra.mxu0 0
        %546 = vmatpush.bf16.msra.mxu0 0
        %547 = vmatpush.bf16.msra.mxu0 %v534
        %548 = vmatpush.bf16.msra.mxu0 %v533
        %549 = vmatmul.bf16.gmra.mxu0 %v539
        %v550 = vpop.f32.mrf.mxu0
        %v551 = vadd.f32 %v523, %v550
        %v552 = vpop.f32.mrf.mxu0
        %553 = vdwg.mxu0
        %v554 = vld [vmem:[%s457] sm:$0x1]
        %v555 = vpack.c.bf16 %v551, %v551
        %v557 = vunpack.c.l.b16 %v555
        %v558 = vpack.c.b16 %v557, %v557
        %559 = vrot.lane.b32.xlu0 %v558, 96
        %v560 = vpop.permute.xlu0 %559
        %vm561 = vcmask 64512
        %v563 = vsel %vm561, %v555, 0
        %v566 = vsel %vm561, %v560, 0
        %568 = vmatpush.bf16.xpose.msra.mxu0 0
        %569 = vmatpush.bf16.xpose.msra.mxu0 0
        %570 = vmatpush.bf16.xpose.msra.mxu0 0
        %571 = vmatpush.bf16.xpose.msra.mxu0 0
        %572 = vmatpush.bf16.xpose.msra.mxu0 0
        %573 = vmatpush.bf16.xpose.msra.mxu0 0
        %574 = vmatpush.bf16.xpose.msra.mxu0 0
        %575 = vmatpush.bf16.xpose.msra.mxu0 %v566
        %576 = vmatmul.bf16.gmra.mxu0 %v563
        %v577 = vpop.f32.mrf.mxu0
        %v578 = vadd.f32 0.0, %v577
        %v579 = vpop.f32.mrf.mxu0
        %580 = vdwg.mxu0
        %v581 = vmul.f32 %v578, 0.35355338
        %v583 = vperm.slane %v554, 0
        %v585 = vadd.f32 %v581, %v583
        %v586 = vsel %vm561, %v585, -inf
        %587 = vmax.xlane.f32.xlu0 %v586
        %v588 = vpop.xlane.xlu0 %587
        %v589 = vsub.f32 %v585, %v588
        %v590 = vmul.f32 %v589, 1.442695
        %v591 = vpow.pop %v590
        %v592 = vsel %vm561, %v591, 0.0
        %593 = vadd.xlane.f32.xlu0 %v592
        %v594 = vpop.xlane.xlu0 %593
        %v595 = vrcp.pop %v594
        %v596 = vmul.f32 %v594, %v595
        %v597 = vsub.f32 1.0, %v596
        %v598 = vmul.f32 %v595, %v597
        %v599 = vadd.f32 %v595, %v598
        %vm600 = vweird.f32 %v594
        %vm601 = vweird.f32 %v595
        %vm602 = vmor %vm600, %vm601
        %v603 = vsel %vm602, %v595, %v599
        %v604 = vand.u32 2147483647, %v594
        %vm605 = vcmp.eq.f32.partialorder %v604, 8.507059e+37
        %v606 = vand.u32 %v594, 2147483648
        %v607 = vor.u32 1.1754944e-38, %v606
        %v608 = vsel %vm605, %v607, %v603
        %v609 = vmul.f32 %v591, %v608
        %v610 = vpack.c.bf16 %v609, %v609
        %611 = vrot.lane.b32.xlu0 %v558, 64
        %v612 = vpop.permute.xlu0 %611
        %v614 = vsel %vm561, %v610, 0
        %vm616 = vcmask 1043456
        %v618 = vsel %vm616, %v612, 0
        %620 = vmatpush.bf16.msra.mxu0 0
        %621 = vmatpush.bf16.msra.mxu0 0
        %622 = vmatpush.bf16.msra.mxu0 0
        %623 = vmatpush.bf16.msra.mxu0 0
        %624 = vmatpush.bf16.msra.mxu0 0
        %625 = vmatpush.bf16.msra.mxu0 0
        %626 = vmatpush.bf16.msra.mxu0 0
        %627 = vmatpush.bf16.msra.mxu0 %v618
        %628 = vmatmul.bf16.gmra.mxu0 %v614
        %v629 = vpop.f32.mrf.mxu0
        %v630 = vadd.f32 0.0, %v629
        %v631 = vpop.f32.mrf.mxu0
        %632 = vdwg.mxu0
        %633 = vrot.lane.b32.xlu0 %v558, 120
        %v634 = vpop.permute.xlu0 %633
        %635 = vrot.lane.b32.xlu0 %v558, 88
        %v636 = vpop.permute.xlu0 %635
        %v638 = vsel %vm561, %v634, 0
        %v641 = vsel %vm561, %v636, 0
        %643 = vmatpush.bf16.xpose.msra.mxu0 0
        %644 = vmatpush.bf16.xpose.msra.mxu0 0
        %645 = vmatpush.bf16.xpose.msra.mxu0 0
        %646 = vmatpush.bf16.xpose.msra.mxu0 0
        %647 = vmatpush.bf16.xpose.msra.mxu0 0
        %648 = vmatpush.bf16.xpose.msra.mxu0 0
        %649 = vmatpush.bf16.xpose.msra.mxu0 0
        %650 = vmatpush.bf16.xpose.msra.mxu0 %v641
        %651 = vmatmul.bf16.gmra.mxu0 %v638
        %v652 = vpop.f32.mrf.mxu0
        %v653 = vadd.f32 0.0, %v652
        %v654 = vpop.f32.mrf.mxu0
        %655 = vdwg.mxu0
        %v656 = vmul.f32 %v653, 0.35355338
        %v657 = vadd.f32 %v656, %v583
        %v658 = vsel %vm561, %v657, -inf
        %659 = vmax.xlane.f32.xlu0 %v658
        %v660 = vpop.xlane.xlu0 %659
        %v661 = vsub.f32 %v657, %v660
        %v662 = vmul.f32 %v661, 1.442695
        %v663 = vpow.pop %v662
        %v664 = vsel %vm561, %v663, 0.0
        %665 = vadd.xlane.f32.xlu0 %v664
        %v666 = vpop.xlane.xlu0 %665
        %v667 = vrcp.pop %v666
        %v668 = vmul.f32 %v666, %v667
        %v669 = vsub.f32 1.0, %v668
        %v670 = vmul.f32 %v667, %v669
        %v671 = vadd.f32 %v667, %v670
        %vm672 = vweird.f32 %v666
        %vm673 = vweird.f32 %v667
        %vm674 = vmor %vm672, %vm673
        %v675 = vsel %vm674, %v667, %v671
        %v676 = vand.u32 2147483647, %v666
        %vm677 = vcmp.eq.f32.partialorder %v676, 8.507059e+37
        %v678 = vand.u32 %v666, 2147483648
        %v679 = vor.u32 1.1754944e-38, %v678
        %v680 = vsel %vm677, %v679, %v675
        %v681 = vmul.f32 %v663, %v680
        %v682 = vpack.c.bf16 %v681, %v681
        %683 = vrot.lane.b32.xlu0 %v558, 56
        %v684 = vpop.permute.xlu0 %683
        %v686 = vsel %vm561, %v682, 0
        %v689 = vsel %vm616, %v684, 0
        %691 = vmatpush.bf16.msra.mxu0 0
        %692 = vmatpush.bf16.msra.mxu0 0
        %693 = vmatpush.bf16.msra.mxu0 0
        %694 = vmatpush.bf16.msra.mxu0 0
        %695 = vmatpush.bf16.msra.mxu0 0
        %696 = vmatpush.bf16.msra.mxu0 0
        %697 = vmatpush.bf16.msra.mxu0 0
        %698 = vmatpush.bf16.msra.mxu0 %v689
        %699 = vmatmul.bf16.gmra.mxu0 %v686
        %v700 = vpop.f32.mrf.mxu0
        %v701 = vadd.f32 0.0, %v700
        %v702 = vpop.f32.mrf.mxu0
        %703 = vdwg.mxu0
        %704 = vrot.lane.b32.xlu0 %v558, 112
        %v705 = vpop.permute.xlu0 %704
        %706 = vrot.lane.b32.xlu0 %v558, 80
        %v707 = vpop.permute.xlu0 %706
        %v709 = vsel %vm561, %v705, 0
        %v712 = vsel %vm561, %v707, 0
        %714 = vmatpush.bf16.xpose.msra.mxu0 0
        %715 = vmatpush.bf16.xpose.msra.mxu0 0
        %716 = vmatpush.bf16.xpose.msra.mxu0 0
        %717 = vmatpush.bf16.xpose.msra.mxu0 0
        %718 = vmatpush.bf16.xpose.msra.mxu0 0
        %719 = vmatpush.bf16.xpose.msra.mxu0 0
        %720 = vmatpush.bf16.xpose.msra.mxu0 0
        %721 = vmatpush.bf16.xpose.msra.mxu0 %v712
        %722 = vmatmul.bf16.gmra.mxu0 %v709
        %v723 = vpop.f32.mrf.mxu0
        %v724 = vadd.f32 0.0, %v723
        %v725 = vpop.f32.mrf.mxu0
        %726 = vdwg.mxu0
        %v727 = vmul.f32 %v724, 0.35355338
        %v728 = vadd.f32 %v727, %v583
        %v729 = vsel %vm561, %v728, -inf
        %730 = vmax.xlane.f32.xlu0 %v729
        %v731 = vpop.xlane.xlu0 %730
        %v732 = vsub.f32 %v728, %v731
        %v733 = vmul.f32 %v732, 1.442695
        %v734 = vpow.pop %v733
        %v735 = vsel %vm561, %v734, 0.0
        %736 = vadd.xlane.f32.xlu0 %v735
        %v737 = vpop.xlane.xlu0 %736
        %v738 = vrcp.pop %v737
        %v739 = vmul.f32 %v737, %v738
        %v740 = vsub.f32 1.0, %v739
        %v741 = vmul.f32 %v738, %v740
        %v742 = vadd.f32 %v738, %v741
        %vm743 = vweird.f32 %v737
        %vm744 = vweird.f32 %v738
        %vm745 = vmor %vm743, %vm744
        %v746 = vsel %vm745, %v738, %v742
        %v747 = vand.u32 2147483647, %v737
        %vm748 = vcmp.eq.f32.partialorder %v747, 8.507059e+37
        %v749 = vand.u32 %v737, 2147483648
        %v750 = vor.u32 1.1754944e-38, %v749
        %v751 = vsel %vm748, %v750, %v746
        %v752 = vmul.f32 %v734, %v751
        %v753 = vpack.c.bf16 %v752, %v752
        %754 = vrot.lane.b32.xlu0 %v558, 48
        %v755 = vpop.permute.xlu0 %754
        %v757 = vsel %vm561, %v753, 0
        %v760 = vsel %vm616, %v755, 0
        %762 = vmatpush.bf16.msra.mxu0 0
        %763 = vmatpush.bf16.msra.mxu0 0
        %764 = vmatpush.bf16.msra.mxu0 0
        %765 = vmatpush.bf16.msra.mxu0 0
        %766 = vmatpush.bf16.msra.mxu0 0
        %767 = vmatpush.bf16.msra.mxu0 0
        %768 = vmatpush.bf16.msra.mxu0 0
        %769 = vmatpush.bf16.msra.mxu0 %v760
        %770 = vmatmul.bf16.gmra.mxu0 %v757
        %v771 = vpop.f32.mrf.mxu0
        %v772 = vadd.f32 0.0, %v771
        %v773 = vpop.f32.mrf.mxu0
        %774 = vdwg.mxu0
        %775 = vrot.lane.b32.xlu0 %v558, 104
        %v776 = vpop.permute.xlu0 %775
        %777 = vrot.lane.b32.xlu0 %v558, 72
        %v778 = vpop.permute.xlu0 %777
        %v780 = vsel %vm561, %v776, 0
        %v783 = vsel %vm561, %v778, 0
        %785 = vmatpush.bf16.xpose.msra.mxu0 0
        %786 = vmatpush.bf16.xpose.msra.mxu0 0
        %787 = vmatpush.bf16.xpose.msra.mxu0 0
        %788 = vmatpush.bf16.xpose.msra.mxu0 0
        %789 = vmatpush.bf16.xpose.msra.mxu0 0
        %790 = vmatpush.bf16.xpose.msra.mxu0 0
        %791 = vmatpush.bf16.xpose.msra.mxu0 0
        %792 = vmatpush.bf16.xpose.msra.mxu0 %v783
        %793 = vmatmul.bf16.gmra.mxu0 %v780
        %v794 = vpop.f32.mrf.mxu0
        %v795 = vadd.f32 0.0, %v794
        %v796 = vpop.f32.mrf.mxu0
        %797 = vdwg.mxu0
        %v798 = vmul.f32 %v795, 0.35355338
        %v799 = vadd.f32 %v798, %v583
        %v800 = vsel %vm561, %v799, -inf
        %801 = vmax.xlane.f32.xlu0 %v800
        %v802 = vpop.xlane.xlu0 %801
        %v803 = vsub.f32 %v799, %v802
        %v804 = vmul.f32 %v803, 1.442695
        %v805 = vpow.pop %v804
        %v806 = vsel %vm561, %v805, 0.0
        %807 = vadd.xlane.f32.xlu0 %v806
        %v808 = vpop.xlane.xlu0 %807
        %v809 = vrcp.pop %v808
        %v810 = vmul.f32 %v808, %v809
        %v811 = vsub.f32 1.0, %v810
        %v812 = vmul.f32 %v809, %v811
        %v813 = vadd.f32 %v809, %v812
        %vm814 = vweird.f32 %v808
        %vm815 = vweird.f32 %v809
        %vm816 = vmor %vm814, %vm815
        %v817 = vsel %vm816, %v809, %v813
        %v818 = vand.u32 2147483647, %v808
        %vm819 = vcmp.eq.f32.partialorder %v818, 8.507059e+37
        %v820 = vand.u32 %v808, 2147483648
        %v821 = vor.u32 1.1754944e-38, %v820
        %v822 = vsel %vm819, %v821, %v817
        %v823 = vmul.f32 %v805, %v822
        %v824 = vpack.c.bf16 %v823, %v823
        %825 = vrot.lane.b32.xlu0 %v558, 40
        %v826 = vpop.permute.xlu0 %825
        %v828 = vsel %vm561, %v824, 0
        %v831 = vsel %vm616, %v826, 0
        %833 = vmatpush.bf16.msra.mxu0 0
        %834 = vmatpush.bf16.msra.mxu0 0
        %835 = vmatpush.bf16.msra.mxu0 0
        %836 = vmatpush.bf16.msra.mxu0 0
        %837 = vmatpush.bf16.msra.mxu0 0
        %838 = vmatpush.bf16.msra.mxu0 0
        %839 = vmatpush.bf16.msra.mxu0 0
        %840 = vmatpush.bf16.msra.mxu0 %v831
        %841 = vmatmul.bf16.gmra.mxu0 %v828
        %v842 = vpop.f32.mrf.mxu0
        %v843 = vadd.f32 0.0, %v842
        %v844 = vpop.f32.mrf.mxu0
        %845 = vdwg.mxu0
        %847 = vrot.lane.b32.xlu0 %v701, 8
        %v848 = vpop.permute.xlu0 %847
        %851 = vrot.lane.b32.xlu0 %v772, 16
        %v852 = vpop.permute.xlu0 %851
        %855 = vrot.lane.b32.xlu0 %v843, 24
        %v856 = vpop.permute.xlu0 %855
        %v858 = vsel %vm561, %v630, %v848
        %vm859 = vcmask 130048
        %v860 = vsel %vm859, %v858, %v852
        %vm861 = vcmask 195584
        %v862 = vsel %vm861, %v860, %v856
        %v863 = vld [vmem:[%s4] sm:$0xf]
        %v864 = vld [vmem:[%s4 + $0x4] sm:$0xf]
        %v865 = vld [vmem:[%s4 + $0x8] sm:$0xf]
        %v866 = vld [vmem:[%s4 + $0xc] sm:$0xf]
        %v867 = vpack.c.bf16 %v862, %v862
        %v868 = vld [vmem:[%s5] sm:$0x1]
        %v870 = vperm.slane %v868, 0
        %v876 = vunpack.c.l.b16 %v863
        %v877 = vunpack.c.l.b16 %v864
        %v878 = vunpack.c.l.b16 %v865
        %v879 = vunpack.c.l.b16 %v866
        %v880 = vpack.c.b16 %v877, %v876
        %v881 = vpack.c.b16 %v879, %v878
        %v885 = vsel %vm537, %v867, 0
        %887 = vmatpush.bf16.msra.mxu0 0
        %888 = vmatpush.bf16.msra.mxu0 0
        %889 = vmatpush.bf16.msra.mxu0 0
        %890 = vmatpush.bf16.msra.mxu0 0
        %891 = vmatpush.bf16.msra.mxu0 0
        %892 = vmatpush.bf16.msra.mxu0 0
        %893 = vmatpush.bf16.msra.mxu0 %v881
        %894 = vmatpush.bf16.msra.mxu0 %v880
        %895 = vmatmul.bf16.gmra.mxu0 %v885
        %v896 = vpop.f32.mrf.mxu0
        %v897 = vadd.f32 %v870, %v896
        %v898 = vpop.f32.mrf.mxu0
        %899 = vdwg.mxu0
        %v900 = vadd.f32 %v897, %v515
        %v901 = vld [vmem:[%s6] sm:$0x1]
        %v902 = vld [vmem:[%s7] sm:$0x1]
        %v903 = vsel %vm537, %v900, 0.0
        %904 = vadd.xlane.f32.xlu0 %v903
        %v905 = vpop.xlane.xlu0 %904
        %v906 = vrcp.pop 32.0
        %v907 = vmul.f32 32.0, %v906
        %v908 = vsub.f32 1.0, %v907
        %v909 = vmul.f32 %v906, %v908
        %v910 = vadd.f32 %v906, %v909
        %vm911 = vweird.f32 %v906
        %v912 = vsel %vm911, %v906, %v910
        %v913 = vmul.f32 %v905, %v912
        %v914 = vsub.f32 %v900, %v913
        %v915 = vmul.f32 %v914, %v914
        %v916 = vsel %vm537, %v915, 0.0
        %917 = vadd.xlane.f32.xlu0 %v916
        %v918 = vpop.xlane.xlu0 %917
        %v919 = vmul.f32 %v918, %v912
        %v920 = vadd.f32 %v919, 1e-12
        %v921 = vrsqrt.pop %v920
        %v922 = vmul.f32 %v921, %v920
        %v923 = vmul.f32 %v922, %v921
        %v924 = vmul.f32 0.5, %v923
        %v925 = vsub.f32 1.5, %v924
        %v926 = vmul.f32 %v921, %v925
        %vm927 = vweird.f32 %v920
        %vm928 = vweird.f32 %v921
        %vm929 = vmor %vm927, %vm928
        %v930 = vsel %vm929, %v921, %v926
        %v931 = vmul.f32 %v914, %v930
        %v933 = vperm.slane %v901, 0
        %v935 = vmul.f32 %v931, %v933
        %v937 = vperm.slane %v902, 0
        %v939 = vadd.f32 %v935, %v937
        %v940 = vld [vmem:[#allocation5] sm:$0xf]
        %v941 = vld [vmem:[#allocation5 + $0x4] sm:$0xf]
        %v942 = vld [vmem:[#allocation5 + $0x8] sm:$0xf]
        %v943 = vld [vmem:[#allocation5 + $0xc] sm:$0xf]
        %v944 = vpack.c.bf16 %v939, %v939
        %v945 = vld [vmem:[%s9] sm:$0x1]
        %v947 = vperm.slane %v945, 0
        %v953 = vunpack.c.l.b16 %v940
        %v954 = vunpack.c.l.b16 %v941
        %v955 = vunpack.c.l.b16 %v942
        %v956 = vunpack.c.l.b16 %v943
        %v957 = vpack.c.b16 %v954, %v953
        %v958 = vpack.c.b16 %v956, %v955
        %v962 = vsel %vm537, %v944, 0
        %964 = vmatpush.bf16.msra.mxu0 0
        %965 = vmatpush.bf16.msra.mxu0 0
        %966 = vmatpush.bf16.msra.mxu0 0
        %967 = vmatpush.bf16.msra.mxu0 0
        %968 = vmatpush.bf16.msra.mxu0 0
        %969 = vmatpush.bf16.msra.mxu0 0
        %970 = vmatpush.bf16.msra.mxu0 %v958
        %971 = vmatpush.bf16.msra.mxu0 %v957
        %972 = vmatmul.bf16.gmra.mxu0 %v962
        %v973 = vpop.f32.mrf.mxu0
        %v974 = vadd.f32 %v947, %v973
        %v975 = vpop.f32.mrf.mxu0
        %976 = vdwg.mxu0
        %v977 = vmul.f32 %v974, %v974
        %v978 = vmul.f32 %v974, %v977
        %v979 = vmul.f32 %v978, 0.044715
        %v980 = vadd.f32 %v974, %v979
        %v981 = vmul.f32 %v980, 0.7978846
        %v982 = vtanh.pop %v981
        %v983 = vadd.f32 %v982, 1.0
        %v984 = vmul.f32 %v983, 0.5
        %v985 = vmul.f32 %v974, %v984
        %v986 = vld [vmem:[%s10] sm:$0xf]
        %v987 = vld [vmem:[%s10 + $0x4] sm:$0xf]
        %v988 = vld [vmem:[%s10 + $0x8] sm:$0xf]
        %v989 = vld [vmem:[%s10 + $0xc] sm:$0xf]
        %v990 = vld [vmem:[%s10 + $0x10] sm:$0xf]
        %v991 = vld [vmem:[%s10 + $0x14] sm:$0xf]
        %v992 = vld [vmem:[%s10 + $0x18] sm:$0xf]
        %v993 = vld [vmem:[%s10 + $0x1c] sm:$0xf]
        %v994 = vpack.c.bf16 %v985, %v985
        %v995 = vld [vmem:[%s11] sm:$0x1]
        %v997 = vperm.slane %v995, 0
        %v1007 = vunpack.c.l.b16 %v986
        %v1008 = vunpack.c.l.b16 %v987
        %v1009 = vunpack.c.l.b16 %v988
        %v1010 = vunpack.c.l.b16 %v989
        %v1011 = vunpack.c.l.b16 %v990
        %v1012 = vunpack.c.l.b16 %v991
        %v1013 = vunpack.c.l.b16 %v992
        %v1014 = vunpack.c.l.b16 %v993
        %v1015 = vpack.c.b16 %v1008, %v1007
        %v1016 = vpack.c.b16 %v1010, %v1009
        %v1017 = vpack.c.b16 %v1012, %v1011
        %v1018 = vpack.c.b16 %v1014, %v1013
        %vm1023 = vcmask 523264
        %v1025 = vsel %vm1023, %v994, 0
        %1027 = vmatpush.bf16.msra.mxu0 0
        %1028 = vmatpush.bf16.msra.mxu0 0
        %1029 = vmatpush.bf16.msra.mxu0 0
        %1030 = vmatpush.bf16.msra.mxu0 0
        %1031 = vmatpush.bf16.msra.mxu0 %v1018
        %1032 = vmatpush.bf16.msra.mxu0 %v1017
        %1033 = vmatpush.bf16.msra.mxu0 %v1016
        %1034 = vmatpush.bf16.msra.mxu0 %v1015
        %1035 = vmatmul.bf16.gmra.mxu0 %v1025
        %v1036 = vpop.f32.mrf.mxu0
        %v1037 = vadd.f32 %v997, %v1036
        %v1038 = vpop.f32.mrf.mxu0
        %1039 = vdwg.mxu0
        %v1040 = vadd.f32 %v1037, %v939
        %v1041 = vld [vmem:[%s12] sm:$0x1]
        %v1042 = vld [vmem:[%s13] sm:$0x1]
        %v1043 = vsel %vm537, %v1040, 0.0
        %1044 = vadd.xlane.f32.xlu0 %v1043
        %v1045 = vpop.xlane.xlu0 %1044
        %v1046 = vmul.f32 %v1045, %v912
        %v1047 = vsub.f32 %v1040, %v1046
        %v1048 = vmul.f32 %v1047, %v1047
        %v1049 = vsel %vm537, %v1048, 0.0
        %1050 = vadd.xlane.f32.xlu0 %v1049
        %v1051 = vpop.xlane.xlu0 %1050
        %v1052 = vmul.f32 %v1051, %v912
        %v1053 = vadd.f32 %v1052, 1e-12
        %v1054 = vrsqrt.pop %v1053
        %v1055 = vmul.f32 %v1054, %v1053
        %v1056 = vmul.f32 %v1055, %v1054
        %v1057 = vmul.f32 0.5, %v1056
        %v1058 = vsub.f32 1.5, %v1057
        %v1059 = vmul.f32 %v1054, %v1058
        %vm1060 = vweird.f32 %v1053
        %vm1061 = vweird.f32 %v1054
        %vm1062 = vmor %vm1060, %vm1061
        %v1063 = vsel %vm1062, %v1054, %v1059
        %v1064 = vmul.f32 %v1047, %v1063
        %v1066 = vperm.slane %v1041, 0
        %v1068 = vmul.f32 %v1064, %v1066
        %v1070 = vperm.slane %v1042, 0
        %v1072 = vadd.f32 %v1068, %v1070
        %v1073 = vsel %vm537, %v1072, -inf
        %v1074 = vrot.slane %v1073, 4
        %v1075 = vmax.f32 %v1073, %v1074
        %v1076 = vrot.slane %v1075, 2
        %v1077 = vmax.f32 %v1075, %v1076
        %v1078 = vrot.slane %v1077, 1
        %v1079 = vmax.f32 %v1077, %v1078
        %vm1080 = vcmask 253952
        %1081 = vst.msk [vmem:[%s509] sm:$0x1] %vm1080, %v1079
        %s1082 = sand.u32 %s344, 1
        %s1083 = scalar_lea.sflag [#allocation4], %s1082
        %s1084 = sand.u32 %s344, 1
        %s1085 = scalar_lea.vmem [#allocation7], %s1084
        // Predicated region
        $region85: #{tpu_custom_call.1} parent=75 // pred_check
          %p1086 = pneg %p354
        $region86: #{tpu_custom_call.1} parent=75 // pred_check_branch
          %1088 = sbr.rel (%p1086) target = $region88
        $region87: #{tpu_custom_call.1} parent=75 // pred_region
          %1090 = vsyncadd %s1083, 0
          %s1091 = scalar_lea.hbm %s14, %s32
          %s1093 = sshll.u32 %s1085, 4
          %s1094 = int_to_ptr.vmem [resolvable:$true] %s1093
          %s1095 = sshll.u32 %s1091, 4
          %s1096 = int_to_ptr.hbm [resolvable:$true] %s1095
          %1098 = dma.vmem_to_hbm [thread:$0]  %s1094, 16, %s1096, %s1083
        $region88: #{tpu_custom_call.1} parent=75 // pred_fallthru
          _
      $region76: #{tpu_custom_call.1} parent=5 // pred_fallthru
        _
      %p1099 = scmp.le.s32.totalorder 2, %s27
      // Predicated region
      $region89: #{tpu_custom_call.1} parent=5 // pred_check
        %p1100 = pneg %p1099
      $region90: #{tpu_custom_call.1} parent=5 // pred_check_branch
        %1102 = sbr.rel (%p1100) target = $region92
      $region91: #{tpu_custom_call.1} parent=5 // pred_region
        %s1103 = ssub.s32 %s27, 2
        // Predicated region
        $region93: #{tpu_custom_call.1} parent=91 // pred_check
          %p1104 = pneg %p360
        $region94: #{tpu_custom_call.1} parent=91 // pred_check_branch
          %1106 = sbr.rel (%p1104) target = $region96
        $region95: #{tpu_custom_call.1} parent=91 // pred_region
          %s1107 = sand.u32 %s345, 1
          %s1108 = scalar_lea.sflag [#allocation4], %s1107
          %s1109 = sand.u32 %s345, 1
          %s1110 = scalar_lea.vmem [#allocation7], %s1109
          %1112 = dma.done %s1108, 16
        $region96: #{tpu_custom_call.1} parent=91 // pred_fallthru
          _
      $region92: #{tpu_custom_call.1} parent=5 // pred_fallthru
        _
    $region6: #{tpu_custom_call.1} parent=1 // loop_footer
      %s31 = sadd.s32 1, %s27
    $region7: #{tpu_custom_call.1} parent=1 // loop_footer_branch
      %26 = sbr.rel target = $region3
    $region8: #{tpu_custom_call.1} parent=1 // loop_exit
      _
    %1113 = vsyncpa [#allocation3], 1
    %s1114 = scalar_lea.sflag [#allocation3], 1
    %1115 = vsyncpa %s1114, 1
    %1116 = vsyncpa [#allocation6], 1
    %1117 = vsyncpa [#allocation4], 1
    %s1118 = scalar_lea.sflag [#allocation4], 1
    %1119 = vsyncpa %s1118, 1

</llo_original>
